<compile_context>
chip_gen: v5e
topology: v5e:2x2
jax: 0.10.0
libtpu: 0.0.40
codegen_flags: <defaults>
</compile_context>

<pallas_src>
import jax
import jax.numpy as jnp
import numpy as np
from jax import lax
from jax.experimental import pallas as pl
from jax.experimental.pallas import tpu as pltpu

TB = 128  # batch tile (rows per grid step); can be raised to 256-512 for big batches


def mf_kernel(uidx_ref, iidx_ref,            # (TB, 1) int32 index tiles (VMEM)
              utab_ref, itab_ref,            # full embedding tables (VMEM-resident)
              out_ref, uemb_ref, iemb_ref):  # output tiles (VMEM)
    uids = uidx_ref[...]                     # (TB, 1)
    iids = iidx_ref[...]                     # (TB, 1)
    utab = utab_ref[...]                     # (NU, K)
    itab = itab_ref[...]                     # (NI, K)

    tb = uids.shape[0]
    nu = utab.shape[0]
    ni = itab.shape[0]

    # Vectorized gather as one-hot @ table on the MXU (no per-row DMA descriptors).
    u_onehot = (lax.broadcasted_iota(jnp.int32, (tb, nu), 1) == uids).astype(utab.dtype)
    i_onehot = (lax.broadcasted_iota(jnp.int32, (tb, ni), 1) == iids).astype(itab.dtype)

    u = jnp.dot(u_onehot, utab,
                preferred_element_type=jnp.float32,
                precision=lax.Precision.HIGHEST)            # (TB, K)
    v = jnp.dot(i_onehot, itab,
                preferred_element_type=jnp.float32,
                precision=lax.Precision.HIGHEST)            # (TB, K)

    uemb_ref[...] = u.astype(uemb_ref.dtype)
    iemb_ref[...] = v.astype(iemb_ref.dtype)
    # out = sum(user_embed * item_embed, axis=1, keepdims=True)
    out_ref[...] = jnp.sum(u * v, axis=-1, keepdims=True).astype(out_ref.dtype)


def mf_forward(x, user_table, item_table, *, tb=TB):
    """Returns (out, user_embed, item_embed), matching MF.forward semantics."""
    B = x.shape[0]
    NU, K = user_table.shape
    NI, _ = item_table.shape

    # Clamp indices (avoid OOB gathers) and pad the batch to a multiple of the tile.
    uidx = jnp.clip(x[:, 0].astype(jnp.int32), 0, NU - 1)
    iidx = jnp.clip(x[:, 1].astype(jnp.int32), 0, NI - 1)
    Bp = ((B + tb - 1) // tb) * tb
    pad = Bp - B
    if pad:
        uidx = jnp.pad(uidx, (0, pad))
        iidx = jnp.pad(iidx, (0, pad))
    uidx = uidx.reshape(Bp, 1)
    iidx = iidx.reshape(Bp, 1)

    cost = pl.CostEstimate(
        flops=2 * Bp * K * (NU + NI + 1),
        transcendentals=0,
        bytes_accessed=4 * ((NU + NI) * K + 2 * Bp + Bp * (2 * K + 1)),
    )

    out, uemb, iemb = pl.pallas_call(
        mf_kernel,
        out_shape=(
            jax.ShapeDtypeStruct((Bp, 1), user_table.dtype),
            jax.ShapeDtypeStruct((Bp, K), user_table.dtype),
            jax.ShapeDtypeStruct((Bp, K), item_table.dtype),
        ),
        grid_spec=pltpu.PrefetchScalarGridSpec(
            num_scalar_prefetch=0,
            grid=(Bp // tb,),
            in_specs=[
                pl.BlockSpec((tb, 1), lambda b: (b, 0)),     # user indices tile
                pl.BlockSpec((tb, 1), lambda b: (b, 0)),     # item indices tile
                pl.BlockSpec((NU, K), lambda b: (0, 0)),     # full user table, VMEM-resident
                pl.BlockSpec((NI, K), lambda b: (0, 0)),     # full item table, VMEM-resident
            ],
            out_specs=(
                pl.BlockSpec((tb, 1), lambda b: (b, 0)),
                pl.BlockSpec((tb, K), lambda b: (b, 0)),
                pl.BlockSpec((tb, K), lambda b: (b, 0)),
            ),
        ),
        compiler_params=pltpu.CompilerParams(
            dimension_semantics=("parallel",)),              # independent tiles -> both TCs on v7x
        cost_estimate=cost,
    )(uidx, iidx, user_table, item_table)

    if pad:
        out, uemb, iemb = out[:B], uemb[:B], iemb[:B]
    return out, uemb, iemb


if __name__ == "__main__":
    num_users, num_items, embedding_k = 64, 96, 32
    B = 8

    key = jax.random.PRNGKey(0)
    ku, ki, kxu, kxi = jax.random.split(key, 4)
    # nn.Embedding default init: N(0, 1)
    user_table = jax.random.normal(ku, (num_users, embedding_k), dtype=jnp.float32)
    item_table = jax.random.normal(ki, (num_items, embedding_k), dtype=jnp.float32)

    uids = jax.random.randint(kxu, (B,), 0, num_users, dtype=jnp.int32)
    iids = jax.random.randint(kxi, (B,), 0, num_items, dtype=jnp.int32)
    x = jnp.stack([uids, iids], axis=1)          # (B, 2) int32

    out, uemb, iemb = mf_forward(x, user_table, item_table)
    jax.block_until_ready((out, uemb, iemb))

    # Pure-JAX reference check
    u_ref = user_table[uids]
    i_ref = item_table[iids]
    o_ref = jnp.sum(u_ref * i_ref, axis=1, keepdims=True)
    assert np.allclose(np.asarray(uemb), np.asarray(u_ref), rtol=1e-5, atol=1e-5)
    assert np.allclose(np.asarray(iemb), np.asarray(i_ref), rtol=1e-5, atol=1e-5)
    assert np.allclose(np.asarray(out), np.asarray(o_ref), rtol=1e-5, atol=1e-4)

    print("KERNEL_OK")
</pallas_src>

<mosaic_0001>
module attributes {stable_mosaic.version = 11 : i64} {
  func.func @mf_kernel(%arg0: i32, %arg1: memref<128x1xi32, #tpu.memory_space<vmem>>, %arg2: memref<128x1xi32, #tpu.memory_space<vmem>>, %arg3: memref<64x32xf32, #tpu.memory_space<vmem>>, %arg4: memref<96x32xf32, #tpu.memory_space<vmem>>, %arg5: memref<128x1xf32, #tpu.memory_space<vmem>>, %arg6: memref<128x32xf32, #tpu.memory_space<vmem>>, %arg7: memref<128x32xf32, #tpu.memory_space<vmem>>) attributes {dimension_semantics = [#tpu.dimension_semantics<parallel>], iteration_bounds = array<i64: 1>, scalar_prefetch = 0 : i64, scratch_operands = 0 : i64, tpu.core_type = #tpu.core_type<tc>, window_params = [{transform_indices = @transform_0, window_bounds = array<i64: 128, 1>}, {transform_indices = @transform_1, window_bounds = array<i64: 128, 1>}, {pipeline_mode = #tpu.pipeline_mode<synchronous>, transform_indices = @transform_2, window_bounds = array<i64: 64, 32>}, {pipeline_mode = #tpu.pipeline_mode<synchronous>, transform_indices = @transform_3, window_bounds = array<i64: 96, 32>}, {transform_indices = @transform_4, window_bounds = array<i64: 128, 1>}, {transform_indices = @transform_5, window_bounds = array<i64: 128, 32>}, {transform_indices = @transform_6, window_bounds = array<i64: 128, 32>}]} {
    %c0 = arith.constant 0 : index
    %c0_0 = arith.constant 0 : index
    %0 = vector.load %arg1[%c0, %c0_0] : memref<128x1xi32, #tpu.memory_space<vmem>>, vector<128x1xi32>
    %c0_1 = arith.constant 0 : index
    %c0_2 = arith.constant 0 : index
    %1 = vector.load %arg2[%c0_1, %c0_2] : memref<128x1xi32, #tpu.memory_space<vmem>>, vector<128x1xi32>
    %c0_3 = arith.constant 0 : index
    %c0_4 = arith.constant 0 : index
    %2 = vector.load %arg3[%c0_3, %c0_4] : memref<64x32xf32, #tpu.memory_space<vmem>>, vector<64x32xf32>
    %c0_5 = arith.constant 0 : index
    %c0_6 = arith.constant 0 : index
    %3 = vector.load %arg4[%c0_5, %c0_6] : memref<96x32xf32, #tpu.memory_space<vmem>>, vector<96x32xf32>
    %4 = tpu.iota {dimensions = array<i32: 1>} : vector<128x64xi32>
    %5 = vector.broadcast %0 : vector<128x1xi32> to vector<128x64xi32>
    %6 = arith.cmpi eq, %4, %5 : vector<128x64xi32>
    %7 = arith.extui %6 : vector<128x64xi1> to vector<128x64xi32>
    %8 = arith.sitofp %7 : vector<128x64xi32> to vector<128x64xf32>
    %9 = tpu.iota {dimensions = array<i32: 1>} : vector<128x96xi32>
    %10 = vector.broadcast %1 : vector<128x1xi32> to vector<128x96xi32>
    %11 = arith.cmpi eq, %9, %10 : vector<128x96xi32>
    %12 = arith.extui %11 : vector<128x96xi1> to vector<128x96xi32>
    %13 = arith.sitofp %12 : vector<128x96xi32> to vector<128x96xf32>
    %cst = arith.constant dense<0.000000e+00> : vector<128x32xf32>
    %14 = tpu.matmul %8, %2, %cst {dimension_numbers = #tpu.dot_dimension_numbers<[1], [0], [0], [1], [0, 0, 1, 1], [], []>, precision = #tpu.contract_precision<fp32>} : vector<128x64xf32>, vector<64x32xf32>, vector<128x32xf32> -> vector<128x32xf32>
    %cst_7 = arith.constant dense<0.000000e+00> : vector<128x32xf32>
    %15 = tpu.matmul %13, %3, %cst_7 {dimension_numbers = #tpu.dot_dimension_numbers<[1], [0], [0], [1], [0, 0, 1, 1], [], []>, precision = #tpu.contract_precision<fp32>} : vector<128x96xf32>, vector<96x32xf32>, vector<128x32xf32> -> vector<128x32xf32>
    %c0_8 = arith.constant 0 : index
    %c0_9 = arith.constant 0 : index
    %16 = vector.load %arg6[%c0_8, %c0_9] : memref<128x32xf32, #tpu.memory_space<vmem>>, vector<128x32xf32>
    tpu.vector_store %arg6[%c0_8, %c0_9], %14 {strides = array<i32>} : memref<128x32xf32, #tpu.memory_space<vmem>>, vector<128x32xf32>,
    %c0_10 = arith.constant 0 : index
    %c0_11 = arith.constant 0 : index
    %17 = vector.load %arg7[%c0_10, %c0_11] : memref<128x32xf32, #tpu.memory_space<vmem>>, vector<128x32xf32>
    tpu.vector_store %arg7[%c0_10, %c0_11], %15 {strides = array<i32>} : memref<128x32xf32, #tpu.memory_space<vmem>>, vector<128x32xf32>,
    %18 = arith.mulf %14, %15 : vector<128x32xf32>
    %cst_12 = arith.constant dense<0.000000e+00> : vector<128xf32>
    %19 = vector.multi_reduction <add>, %18, %cst_12 [1] : vector<128x32xf32> to vector<128xf32>
    %20 = vector.shape_cast %19 : vector<128xf32> to vector<128x1xf32>
    %c0_13 = arith.constant 0 : index
    %c0_14 = arith.constant 0 : index
    %21 = vector.load %arg5[%c0_13, %c0_14] : memref<128x1xf32, #tpu.memory_space<vmem>>, vector<128x1xf32>
    tpu.vector_store %arg5[%c0_13, %c0_14], %20 {strides = array<i32>} : memref<128x1xf32, #tpu.memory_space<vmem>>, vector<128x1xf32>,
    return
  }
  func.func @transform_0(%arg0: i32) -> (i32, i32) {
    %c0_i32 = arith.constant 0 : i32
    %c0_i32_0 = arith.constant 0 : i32
    return %arg0, %c0_i32 : i32, i32
  }
  func.func @transform_1(%arg0: i32) -> (i32, i32) {
    %c0_i32 = arith.constant 0 : i32
    %c0_i32_0 = arith.constant 0 : i32
    return %arg0, %c0_i32 : i32, i32
  }
  func.func @transform_2(%arg0: i32) -> (i32, i32) {
    %c0_i32 = arith.constant 0 : i32
    %c0_i32_0 = arith.constant 0 : i32
    %c0_i32_1 = arith.constant 0 : i32
    return %c0_i32, %c0_i32_0 : i32, i32
  }
  func.func @transform_3(%arg0: i32) -> (i32, i32) {
    %c0_i32 = arith.constant 0 : i32
    %c0_i32_0 = arith.constant 0 : i32
    %c0_i32_1 = arith.constant 0 : i32
    return %c0_i32, %c0_i32_0 : i32, i32
  }
  func.func @transform_4(%arg0: i32) -> (i32, i32) {
    %c0_i32 = arith.constant 0 : i32
    %c0_i32_0 = arith.constant 0 : i32
    return %arg0, %c0_i32 : i32, i32
  }
  func.func @transform_5(%arg0: i32) -> (i32, i32) {
    %c0_i32 = arith.constant 0 : i32
    %c0_i32_0 = arith.constant 0 : i32
    return %arg0, %c0_i32 : i32, i32
  }
  func.func @transform_6(%arg0: i32) -> (i32, i32) {
    %c0_i32 = arith.constant 0 : i32
    %c0_i32_0 = arith.constant 0 : i32
    return %arg0, %c0_i32 : i32, i32
  }
}

</mosaic_0001>

<llo_original>
// kernel: tpu_custom_call.1
$region0: #{tpu_custom_call.1}
  #allocation0 [shape = 'u32[]', space=smem, size = 0x4, offset = 0x4, fixed_abs, tag = 'smem constant byte address 0x4 - core index']
  #allocation1 [shape = 'u32[72,128]{1,0:T(1,128)}', space=vmem, size = 0x9000, scoped, tag = 'internal scratch']
  %s0 = inlined_call_operand.vmem [shape: s32[128,1], index: 0, kind: input, shape index: {}]
  %s1 = inlined_call_operand.vmem [shape: s32[128,1], index: 1, kind: input, shape index: {}]
  %s2 = inlined_call_operand.vmem [shape: f32[64,32], index: 2, kind: input, shape index: {}]
  %s3 = inlined_call_operand.vmem [shape: f32[96,32], index: 3, kind: input, shape index: {}]
  %s4 = inlined_call_operand.vmem [shape: f32[128,1], index: 4, kind: output, shape index: {0}]
  %s5 = inlined_call_operand.vmem [shape: f32[128,32], index: 5, kind: output, shape index: {1}]
  %s6 = inlined_call_operand.vmem [shape: f32[128,32], index: 6, kind: output, shape index: {2}]
  %7 = xla_tuple %s4, %s5, %s6
  %s8 = sld [smem:[#allocation0]]
  $region42: #{tpu_custom_call.1} parent=0
    _
  %s10 = ssub.s32 1, %s8
  %s11 = scalar_select 0, %s10, %s8
  // Predicated region
  $region2: #{tpu_custom_call.1} parent=0 // pred_check
    _
  $region3: #{tpu_custom_call.1} parent=0 // pred_check_branch
    %13 = sbr.rel (0) target = $region5
  $region4: #{tpu_custom_call.1} parent=0 // pred_region
    _
  $region5: #{tpu_custom_call.1} parent=0 // pred_fallthru
    _
  // Predicated region
  $region6: #{tpu_custom_call.1} parent=0 // pred_check
    _
  $region7: #{tpu_custom_call.1} parent=0 // pred_check_branch
    %15 = sbr.rel (0) target = $region9
  $region8: #{tpu_custom_call.1} parent=0 // pred_region
    _
  $region9: #{tpu_custom_call.1} parent=0 // pred_fallthru
    _
  // Predicated region
  $region10: #{tpu_custom_call.1} parent=0 // pred_check
    _
  $region11: #{tpu_custom_call.1} parent=0 // pred_check_branch
    %17 = sbr.rel (0) target = $region13
  $region12: #{tpu_custom_call.1} parent=0 // pred_region
    _
  $region13: #{tpu_custom_call.1} parent=0 // pred_fallthru
    _
  // Predicated region
  $region14: #{tpu_custom_call.1} parent=0 // pred_check
    _
  $region15: #{tpu_custom_call.1} parent=0 // pred_check_branch
    %19 = sbr.rel (0) target = $region17
  $region16: #{tpu_custom_call.1} parent=0 // pred_region
    _
  $region17: #{tpu_custom_call.1} parent=0 // pred_fallthru
    _
  %v20 = vld [vmem:[%s0] sm:$0xff]
  %v21 = vld [vmem:[%s0 + $0x8] sm:$0xff]
  %v22 = vld [vmem:[%s0 + $0x10] sm:$0xff]
  %v23 = vld [vmem:[%s0 + $0x18] sm:$0xff]
  %v24 = vld [vmem:[%s0 + $0x20] sm:$0xff]
  %v25 = vld [vmem:[%s0 + $0x28] sm:$0xff]
  %v26 = vld [vmem:[%s0 + $0x30] sm:$0xff]
  %v27 = vld [vmem:[%s0 + $0x38] sm:$0xff]
  %v28 = vld [vmem:[%s0 + $0x40] sm:$0xff]
  %v29 = vld [vmem:[%s0 + $0x48] sm:$0xff]
  %v30 = vld [vmem:[%s0 + $0x50] sm:$0xff]
  %v31 = vld [vmem:[%s0 + $0x58] sm:$0xff]
  %v32 = vld [vmem:[%s0 + $0x60] sm:$0xff]
  %v33 = vld [vmem:[%s0 + $0x68] sm:$0xff]
  %v34 = vld [vmem:[%s0 + $0x70] sm:$0xff]
  %v35 = vld [vmem:[%s0 + $0x78] sm:$0xff]
  %v36 = vld [vmem:[%s1] sm:$0xff]
  %v37 = vld [vmem:[%s1 + $0x8] sm:$0xff]
  %v38 = vld [vmem:[%s1 + $0x10] sm:$0xff]
  %v39 = vld [vmem:[%s1 + $0x18] sm:$0xff]
  %v40 = vld [vmem:[%s1 + $0x20] sm:$0xff]
  %v41 = vld [vmem:[%s1 + $0x28] sm:$0xff]
  %v42 = vld [vmem:[%s1 + $0x30] sm:$0xff]
  %v43 = vld [vmem:[%s1 + $0x38] sm:$0xff]
  %v44 = vld [vmem:[%s1 + $0x40] sm:$0xff]
  %v45 = vld [vmem:[%s1 + $0x48] sm:$0xff]
  %v46 = vld [vmem:[%s1 + $0x50] sm:$0xff]
  %v47 = vld [vmem:[%s1 + $0x58] sm:$0xff]
  %v48 = vld [vmem:[%s1 + $0x60] sm:$0xff]
  %v49 = vld [vmem:[%s1 + $0x68] sm:$0xff]
  %v50 = vld [vmem:[%s1 + $0x70] sm:$0xff]
  %v51 = vld [vmem:[%s1 + $0x78] sm:$0xff]
  %v52 = vld [vmem:[%s2] sm:$0xff]
  %v53 = vld [vmem:[%s2 + $0x8] sm:$0xff]
  %v54 = vld [vmem:[%s2 + $0x10] sm:$0xff]
  %v55 = vld [vmem:[%s2 + $0x18] sm:$0xff]
  %v56 = vld [vmem:[%s2 + $0x20] sm:$0xff]
  %v57 = vld [vmem:[%s2 + $0x28] sm:$0xff]
  %v58 = vld [vmem:[%s2 + $0x30] sm:$0xff]
  %v59 = vld [vmem:[%s2 + $0x38] sm:$0xff]
  %v60 = vld [vmem:[%s3] sm:$0xff]
  %v61 = vld [vmem:[%s3 + $0x8] sm:$0xff]
  %v62 = vld [vmem:[%s3 + $0x10] sm:$0xff]
  %v63 = vld [vmem:[%s3 + $0x18] sm:$0xff]
  %v64 = vld [vmem:[%s3 + $0x20] sm:$0xff]
  %v65 = vld [vmem:[%s3 + $0x28] sm:$0xff]
  %v66 = vld [vmem:[%s3 + $0x30] sm:$0xff]
  %v67 = vld [vmem:[%s3 + $0x38] sm:$0xff]
  %v68 = vld [vmem:[%s3 + $0x40] sm:$0xff]
  %v69 = vld [vmem:[%s3 + $0x48] sm:$0xff]
  %v70 = vld [vmem:[%s3 + $0x50] sm:$0xff]
  %v71 = vld [vmem:[%s3 + $0x58] sm:$0xff]
  %v72 = vlaneseq
  %v73 = vand.u32 %v72, 127
  %74 = vset.pattern.permute.xlu0 0
  %75 = vperm.xlu0 %74, %v20
  %v76 = vpop.permute.xlu0 %75
  %77 = vset.pattern.permute.xlu0 0
  %78 = vperm.xlu0 %77, %v21
  %v79 = vpop.permute.xlu0 %78
  %80 = vset.pattern.permute.xlu0 0
  %81 = vperm.xlu0 %80, %v22
  %v82 = vpop.permute.xlu0 %81
  %83 = vset.pattern.permute.xlu0 0
  %84 = vperm.xlu0 %83, %v23
  %v85 = vpop.permute.xlu0 %84
  %86 = vset.pattern.permute.xlu0 0
  %87 = vperm.xlu0 %86, %v24
  %v88 = vpop.permute.xlu0 %87
  %89 = vset.pattern.permute.xlu0 0
  %90 = vperm.xlu0 %89, %v25
  %v91 = vpop.permute.xlu0 %90
  %92 = vset.pattern.permute.xlu0 0
  %93 = vperm.xlu0 %92, %v26
  %v94 = vpop.permute.xlu0 %93
  %95 = vset.pattern.permute.xlu0 0
  %96 = vperm.xlu0 %95, %v27
  %v97 = vpop.permute.xlu0 %96
  %98 = vset.pattern.permute.xlu0 0
  %99 = vperm.xlu0 %98, %v28
  %v100 = vpop.permute.xlu0 %99
  %101 = vset.pattern.permute.xlu0 0
  %102 = vperm.xlu0 %101, %v29
  %v103 = vpop.permute.xlu0 %102
  %104 = vset.pattern.permute.xlu0 0
  %105 = vperm.xlu0 %104, %v30
  %v106 = vpop.permute.xlu0 %105
  %107 = vset.pattern.permute.xlu0 0
  %108 = vperm.xlu0 %107, %v31
  %v109 = vpop.permute.xlu0 %108
  %110 = vset.pattern.permute.xlu0 0
  %111 = vperm.xlu0 %110, %v32
  %v112 = vpop.permute.xlu0 %111
  %113 = vset.pattern.permute.xlu0 0
  %114 = vperm.xlu0 %113, %v33
  %v115 = vpop.permute.xlu0 %114
  %116 = vset.pattern.permute.xlu0 0
  %117 = vperm.xlu0 %116, %v34
  %v118 = vpop.permute.xlu0 %117
  %119 = vset.pattern.permute.xlu0 0
  %120 = vperm.xlu0 %119, %v35
  %v121 = vpop.permute.xlu0 %120
  %vm122 = vcmp.eq.s32.totalorder %v73, %v76
  %vm123 = vcmp.eq.s32.totalorder %v73, %v79
  %vm124 = vcmp.eq.s32.totalorder %v73, %v82
  %vm125 = vcmp.eq.s32.totalorder %v73, %v85
  %vm126 = vcmp.eq.s32.totalorder %v73, %v88
  %vm127 = vcmp.eq.s32.totalorder %v73, %v91
  %vm128 = vcmp.eq.s32.totalorder %v73, %v94
  %vm129 = vcmp.eq.s32.totalorder %v73, %v97
  %vm130 = vcmp.eq.s32.totalorder %v73, %v100
  %vm131 = vcmp.eq.s32.totalorder %v73, %v103
  %vm132 = vcmp.eq.s32.totalorder %v73, %v106
  %vm133 = vcmp.eq.s32.totalorder %v73, %v109
  %vm134 = vcmp.eq.s32.totalorder %v73, %v112
  %vm135 = vcmp.eq.s32.totalorder %v73, %v115
  %vm136 = vcmp.eq.s32.totalorder %v73, %v118
  %vm137 = vcmp.eq.s32.totalorder %v73, %v121
  %v138 = vsel %vm122, 1, 0
  %v139 = vsel %vm123, 1, 0
  %v140 = vsel %vm124, 1, 0
  %v141 = vsel %vm125, 1, 0
  %v142 = vsel %vm126, 1, 0
  %v143 = vsel %vm127, 1, 0
  %v144 = vsel %vm128, 1, 0
  %v145 = vsel %vm129, 1, 0
  %v146 = vsel %vm130, 1, 0
  %v147 = vsel %vm131, 1, 0
  %v148 = vsel %vm132, 1, 0
  %v149 = vsel %vm133, 1, 0
  %v150 = vsel %vm134, 1, 0
  %v151 = vsel %vm135, 1, 0
  %v152 = vsel %vm136, 1, 0
  %v153 = vsel %vm137, 1, 0
  %v154 = vcvt.s32.f32 %v138
  %v155 = vcvt.s32.f32 %v139
  %v156 = vcvt.s32.f32 %v140
  %v157 = vcvt.s32.f32 %v141
  %v158 = vcvt.s32.f32 %v142
  %v159 = vcvt.s32.f32 %v143
  %v160 = vcvt.s32.f32 %v144
  %v161 = vcvt.s32.f32 %v145
  %v162 = vcvt.s32.f32 %v146
  %v163 = vcvt.s32.f32 %v147
  %v164 = vcvt.s32.f32 %v148
  %v165 = vcvt.s32.f32 %v149
  %v166 = vcvt.s32.f32 %v150
  %v167 = vcvt.s32.f32 %v151
  %v168 = vcvt.s32.f32 %v152
  %v169 = vcvt.s32.f32 %v153
  %170 = vset.pattern.permute.xlu0 0
  %171 = vperm.xlu0 %170, %v36
  %v172 = vpop.permute.xlu0 %171
  %173 = vset.pattern.permute.xlu0 0
  %174 = vperm.xlu0 %173, %v37
  %v175 = vpop.permute.xlu0 %174
  %176 = vset.pattern.permute.xlu0 0
  %177 = vperm.xlu0 %176, %v38
  %v178 = vpop.permute.xlu0 %177
  %179 = vset.pattern.permute.xlu0 0
  %180 = vperm.xlu0 %179, %v39
  %v181 = vpop.permute.xlu0 %180
  %182 = vset.pattern.permute.xlu0 0
  %183 = vperm.xlu0 %182, %v40
  %v184 = vpop.permute.xlu0 %183
  %185 = vset.pattern.permute.xlu0 0
  %186 = vperm.xlu0 %185, %v41
  %v187 = vpop.permute.xlu0 %186
  %188 = vset.pattern.permute.xlu0 0
  %189 = vperm.xlu0 %188, %v42
  %v190 = vpop.permute.xlu0 %189
  %191 = vset.pattern.permute.xlu0 0
  %192 = vperm.xlu0 %191, %v43
  %v193 = vpop.permute.xlu0 %192
  %194 = vset.pattern.permute.xlu0 0
  %195 = vperm.xlu0 %194, %v44
  %v196 = vpop.permute.xlu0 %195
  %197 = vset.pattern.permute.xlu0 0
  %198 = vperm.xlu0 %197, %v45
  %v199 = vpop.permute.xlu0 %198
  %200 = vset.pattern.permute.xlu0 0
  %201 = vperm.xlu0 %200, %v46
  %v202 = vpop.permute.xlu0 %201
  %203 = vset.pattern.permute.xlu0 0
  %204 = vperm.xlu0 %203, %v47
  %v205 = vpop.permute.xlu0 %204
  %206 = vset.pattern.permute.xlu0 0
  %207 = vperm.xlu0 %206, %v48
  %v208 = vpop.permute.xlu0 %207
  %209 = vset.pattern.permute.xlu0 0
  %210 = vperm.xlu0 %209, %v49
  %v211 = vpop.permute.xlu0 %210
  %212 = vset.pattern.permute.xlu0 0
  %213 = vperm.xlu0 %212, %v50
  %v214 = vpop.permute.xlu0 %213
  %215 = vset.pattern.permute.xlu0 0
  %216 = vperm.xlu0 %215, %v51
  %v217 = vpop.permute.xlu0 %216
  %vm218 = vcmp.eq.s32.totalorder %v73, %v172
  %vm219 = vcmp.eq.s32.totalorder %v73, %v175
  %vm220 = vcmp.eq.s32.totalorder %v73, %v178
  %vm221 = vcmp.eq.s32.totalorder %v73, %v181
  %vm222 = vcmp.eq.s32.totalorder %v73, %v184
  %vm223 = vcmp.eq.s32.totalorder %v73, %v187
  %vm224 = vcmp.eq.s32.totalorder %v73, %v190
  %vm225 = vcmp.eq.s32.totalorder %v73, %v193
  %vm226 = vcmp.eq.s32.totalorder %v73, %v196
  %vm227 = vcmp.eq.s32.totalorder %v73, %v199
  %vm228 = vcmp.eq.s32.totalorder %v73, %v202
  %vm229 = vcmp.eq.s32.totalorder %v73, %v205
  %vm230 = vcmp.eq.s32.totalorder %v73, %v208
  %vm231 = vcmp.eq.s32.totalorder %v73, %v211
  %vm232 = vcmp.eq.s32.totalorder %v73, %v214
  %vm233 = vcmp.eq.s32.totalorder %v73, %v217
  %v234 = vsel %vm218, 1, 0
  %v235 = vsel %vm219, 1, 0
  %v236 = vsel %vm220, 1, 0
  %v237 = vsel %vm221, 1, 0
  %v238 = vsel %vm222, 1, 0
  %v239 = vsel %vm223, 1, 0
  %v240 = vsel %vm224, 1, 0
  %v241 = vsel %vm225, 1, 0
  %v242 = vsel %vm226, 1, 0
  %v243 = vsel %vm227, 1, 0
  %v244 = vsel %vm228, 1, 0
  %v245 = vsel %vm229, 1, 0
  %v246 = vsel %vm230, 1, 0
  %v247 = vsel %vm231, 1, 0
  %v248 = vsel %vm232, 1, 0
  %v249 = vsel %vm233, 1, 0
  %v250 = vcvt.s32.f32 %v234
  %v251 = vcvt.s32.f32 %v235
  %v252 = vcvt.s32.f32 %v236
  %v253 = vcvt.s32.f32 %v237
  %v254 = vcvt.s32.f32 %v238
  %v255 = vcvt.s32.f32 %v239
  %v256 = vcvt.s32.f32 %v240
  %v257 = vcvt.s32.f32 %v241
  %v258 = vcvt.s32.f32 %v242
  %v259 = vcvt.s32.f32 %v243
  %v260 = vcvt.s32.f32 %v244
  %v261 = vcvt.s32.f32 %v245
  %v262 = vcvt.s32.f32 %v246
  %v263 = vcvt.s32.f32 %v247
  %v264 = vcvt.s32.f32 %v248
  %v265 = vcvt.s32.f32 %v249
  %vm266 = vcmask 523264
  %v268 = vsel %vm266, %v154, 0
  %v271 = vsel %vm266, %v155, 0
  %v274 = vsel %vm266, %v156, 0
  %v277 = vsel %vm266, %v157, 0
  %v280 = vsel %vm266, %v158, 0
  %v283 = vsel %vm266, %v159, 0
  %v286 = vsel %vm266, %v160, 0
  %v289 = vsel %vm266, %v161, 0
  %v292 = vsel %vm266, %v162, 0
  %v295 = vsel %vm266, %v163, 0
  %v298 = vsel %vm266, %v164, 0
  %v301 = vsel %vm266, %v165, 0
  %v304 = vsel %vm266, %v166, 0
  %v307 = vsel %vm266, %v167, 0
  %v310 = vsel %vm266, %v168, 0
  %v313 = vsel %vm266, %v169, 0
  %315 = vmatpush.msra.mxu0 0.0
  %316 = vmatpush.msra.mxu0 0.0
  %317 = vmatpush.msra.mxu0 0.0
  %318 = vmatpush.msra.mxu0 0.0
  %319 = vmatpush.msra.mxu0 0.0
  %320 = vmatpush.msra.mxu0 0.0
  %321 = vmatpush.msra.mxu0 0.0
  %322 = vmatpush.msra.mxu0 0.0
  %v323 = vand.u32 %v59, 4294901760
  %324 = vmatpush.msra.mxu0 %v323
  %v325 = vand.u32 %v58, 4294901760
  %326 = vmatpush.msra.mxu0 %v325
  %v327 = vand.u32 %v57, 4294901760
  %328 = vmatpush.msra.mxu0 %v327
  %v329 = vand.u32 %v56, 4294901760
  %330 = vmatpush.msra.mxu0 %v329
  %v331 = vand.u32 %v55, 4294901760
  %332 = vmatpush.msra.mxu0 %v331
  %v333 = vand.u32 %v54, 4294901760
  %334 = vmatpush.msra.mxu0 %v333
  %v335 = vand.u32 %v53, 4294901760
  %336 = vmatpush.msra.mxu0 %v335
  %v337 = vand.u32 %v52, 4294901760
  %338 = vmatpush.msra.mxu0 %v337
  %v339 = vand.u32 %v268, 4294901760
  %v340 = vsub.f32 %v268, %v339
  %v341 = vand.u32 %v340, 4294901760
  %v342 = vsub.f32 %v340, %v341
  %v343 = vand.u32 %v342, 4294901760
  %344 = vmatmul.f32.gmra.mxu0 %v343
  %v345 = vpop.f32.mrf.mxu0
  %v346 = vadd.f32 0.0, %v345
  %v347 = vand.u32 %v271, 4294901760
  %v348 = vsub.f32 %v271, %v347
  %v349 = vand.u32 %v348, 4294901760
  %v350 = vsub.f32 %v348, %v349
  %v351 = vand.u32 %v350, 4294901760
  %352 = vmatmul.f32.gmra.mxu0 %v351
  %v353 = vpop.f32.mrf.mxu0
  %v354 = vadd.f32 0.0, %v353
  %v355 = vand.u32 %v274, 4294901760
  %v356 = vsub.f32 %v274, %v355
  %v357 = vand.u32 %v356, 4294901760
  %v358 = vsub.f32 %v356, %v357
  %v359 = vand.u32 %v358, 4294901760
  %360 = vmatmul.f32.gmra.mxu0 %v359
  %v361 = vpop.f32.mrf.mxu0
  %v362 = vadd.f32 0.0, %v361
  %v363 = vand.u32 %v277, 4294901760
  %v364 = vsub.f32 %v277, %v363
  %v365 = vand.u32 %v364, 4294901760
  %v366 = vsub.f32 %v364, %v365
  %v367 = vand.u32 %v366, 4294901760
  %368 = vmatmul.f32.gmra.mxu0 %v367
  %v369 = vpop.f32.mrf.mxu0
  %v370 = vadd.f32 0.0, %v369
  %v371 = vand.u32 %v280, 4294901760
  %v372 = vsub.f32 %v280, %v371
  %v373 = vand.u32 %v372, 4294901760
  %v374 = vsub.f32 %v372, %v373
  %v375 = vand.u32 %v374, 4294901760
  %376 = vmatmul.f32.gmra.mxu0 %v375
  %v377 = vpop.f32.mrf.mxu0
  %v378 = vadd.f32 0.0, %v377
  %v379 = vand.u32 %v283, 4294901760
  %v380 = vsub.f32 %v283, %v379
  %v381 = vand.u32 %v380, 4294901760
  %v382 = vsub.f32 %v380, %v381
  %v383 = vand.u32 %v382, 4294901760
  %384 = vmatmul.f32.gmra.mxu0 %v383
  %v385 = vpop.f32.mrf.mxu0
  %v386 = vadd.f32 0.0, %v385
  %v387 = vand.u32 %v286, 4294901760
  %v388 = vsub.f32 %v286, %v387
  %v389 = vand.u32 %v388, 4294901760
  %v390 = vsub.f32 %v388, %v389
  %v391 = vand.u32 %v390, 4294901760
  %392 = vmatmul.f32.gmra.mxu0 %v391
  %v393 = vpop.f32.mrf.mxu0
  %v394 = vadd.f32 0.0, %v393
  %v395 = vand.u32 %v289, 4294901760
  %v396 = vsub.f32 %v289, %v395
  %v397 = vand.u32 %v396, 4294901760
  %v398 = vsub.f32 %v396, %v397
  %v399 = vand.u32 %v398, 4294901760
  %400 = vmatmul.f32.gmra.mxu0 %v399
  %v401 = vpop.f32.mrf.mxu0
  %v402 = vadd.f32 0.0, %v401
  %v403 = vand.u32 %v292, 4294901760
  %v404 = vsub.f32 %v292, %v403
  %v405 = vand.u32 %v404, 4294901760
  %v406 = vsub.f32 %v404, %v405
  %v407 = vand.u32 %v406, 4294901760
  %408 = vmatmul.f32.gmra.mxu0 %v407
  %v409 = vpop.f32.mrf.mxu0
  %v410 = vadd.f32 0.0, %v409
  %v411 = vand.u32 %v295, 4294901760
  %v412 = vsub.f32 %v295, %v411
  %v413 = vand.u32 %v412, 4294901760
  %v414 = vsub.f32 %v412, %v413
  %v415 = vand.u32 %v414, 4294901760
  %416 = vmatmul.f32.gmra.mxu0 %v415
  %v417 = vpop.f32.mrf.mxu0
  %v418 = vadd.f32 0.0, %v417
  %v419 = vand.u32 %v298, 4294901760
  %v420 = vsub.f32 %v298, %v419
  %v421 = vand.u32 %v420, 4294901760
  %v422 = vsub.f32 %v420, %v421
  %v423 = vand.u32 %v422, 4294901760
  %424 = vmatmul.f32.gmra.mxu0 %v423
  %v425 = vpop.f32.mrf.mxu0
  %v426 = vadd.f32 0.0, %v425
  %v427 = vand.u32 %v301, 4294901760
  %v428 = vsub.f32 %v301, %v427
  %v429 = vand.u32 %v428, 4294901760
  %v430 = vsub.f32 %v428, %v429
  %v431 = vand.u32 %v430, 4294901760
  %432 = vmatmul.f32.gmra.mxu0 %v431
  %v433 = vpop.f32.mrf.mxu0
  %v434 = vadd.f32 0.0, %v433
  %v435 = vand.u32 %v304, 4294901760
  %v436 = vsub.f32 %v304, %v435
  %v437 = vand.u32 %v436, 4294901760
  %v438 = vsub.f32 %v436, %v437
  %v439 = vand.u32 %v438, 4294901760
  %440 = vmatmul.f32.gmra.mxu0 %v439
  %v441 = vpop.f32.mrf.mxu0
  %v442 = vadd.f32 0.0, %v441
  %v443 = vand.u32 %v307, 4294901760
  %v444 = vsub.f32 %v307, %v443
  %v445 = vand.u32 %v444, 4294901760
  %v446 = vsub.f32 %v444, %v445
  %v447 = vand.u32 %v446, 4294901760
  %448 = vmatmul.f32.gmra.mxu0 %v447
  %v449 = vpop.f32.mrf.mxu0
  %v450 = vadd.f32 0.0, %v449
  %v451 = vand.u32 %v310, 4294901760
  %v452 = vsub.f32 %v310, %v451
  %v453 = vand.u32 %v452, 4294901760
  %v454 = vsub.f32 %v452, %v453
  %v455 = vand.u32 %v454, 4294901760
  %456 = vmatmul.f32.gmra.mxu0 %v455
  %v457 = vpop.f32.mrf.mxu0
  %v458 = vadd.f32 0.0, %v457
  %v459 = vand.u32 %v313, 4294901760
  %v460 = vsub.f32 %v313, %v459
  %v461 = vand.u32 %v460, 4294901760
  %v462 = vsub.f32 %v460, %v461
  %v463 = vand.u32 %v462, 4294901760
  %464 = vmatmul.f32.gmra.mxu0 %v463
  %v465 = vpop.f32.mrf.mxu0
  %v466 = vadd.f32 0.0, %v465
  %467 = vdwg.mxu0
  %468 = vmatpush.msra.mxu0 0.0
  %469 = vmatpush.msra.mxu0 0.0
  %470 = vmatpush.msra.mxu0 0.0
  %471 = vmatpush.msra.mxu0 0.0
  %472 = vmatpush.msra.mxu0 0.0
  %473 = vmatpush.msra.mxu0 0.0
  %474 = vmatpush.msra.mxu0 0.0
  %475 = vmatpush.msra.mxu0 0.0
  %v476 = vand.u32 %v59, 4294901760
  %v477 = vsub.f32 %v59, %v476
  %v478 = vand.u32 %v477, 4294901760
  %v479 = vsub.f32 %v477, %v478
  %v480 = vand.u32 %v479, 4294901760
  %481 = vmatpush.msra.mxu0 %v480
  %v482 = vand.u32 %v58, 4294901760
  %v483 = vsub.f32 %v58, %v482
  %v484 = vand.u32 %v483, 4294901760
  %v485 = vsub.f32 %v483, %v484
  %v486 = vand.u32 %v485, 4294901760
  %487 = vmatpush.msra.mxu0 %v486
  %v488 = vand.u32 %v57, 4294901760
  %v489 = vsub.f32 %v57, %v488
  %v490 = vand.u32 %v489, 4294901760
  %v491 = vsub.f32 %v489, %v490
  %v492 = vand.u32 %v491, 4294901760
  %493 = vmatpush.msra.mxu0 %v492
  %v494 = vand.u32 %v56, 4294901760
  %v495 = vsub.f32 %v56, %v494
  %v496 = vand.u32 %v495, 4294901760
  %v497 = vsub.f32 %v495, %v496
  %v498 = vand.u32 %v497, 4294901760
  %499 = vmatpush.msra.mxu0 %v498
  %v500 = vand.u32 %v55, 4294901760
  %v501 = vsub.f32 %v55, %v500
  %v502 = vand.u32 %v501, 4294901760
  %v503 = vsub.f32 %v501, %v502
  %v504 = vand.u32 %v503, 4294901760
  %505 = vmatpush.msra.mxu0 %v504
  %v506 = vand.u32 %v54, 4294901760
  %v507 = vsub.f32 %v54, %v506
  %v508 = vand.u32 %v507, 4294901760
  %v509 = vsub.f32 %v507, %v508
  %v510 = vand.u32 %v509, 4294901760
  %511 = vmatpush.msra.mxu0 %v510
  %v512 = vand.u32 %v53, 4294901760
  %v513 = vsub.f32 %v53, %v512
  %v514 = vand.u32 %v513, 4294901760
  %v515 = vsub.f32 %v513, %v514
  %v516 = vand.u32 %v515, 4294901760
  %517 = vmatpush.msra.mxu0 %v516
  %v518 = vand.u32 %v52, 4294901760
  %v519 = vsub.f32 %v52, %v518
  %v520 = vand.u32 %v519, 4294901760
  %v521 = vsub.f32 %v519, %v520
  %v522 = vand.u32 %v521, 4294901760
  %523 = vmatpush.msra.mxu0 %v522
  %v524 = vand.u32 %v268, 4294901760
  %525 = vmatmul.f32.gmra.mxu0 %v524
  %v526 = vpop.f32.mrf.mxu0
  %v527 = vadd.f32 %v346, %v526
  %v528 = vand.u32 %v271, 4294901760
  %529 = vmatmul.f32.gmra.mxu0 %v528
  %v530 = vpop.f32.mrf.mxu0
  %v531 = vadd.f32 %v354, %v530
  %v532 = vand.u32 %v274, 4294901760
  %533 = vmatmul.f32.gmra.mxu0 %v532
  %v534 = vpop.f32.mrf.mxu0
  %v535 = vadd.f32 %v362, %v534
  %v536 = vand.u32 %v277, 4294901760
  %537 = vmatmul.f32.gmra.mxu0 %v536
  %v538 = vpop.f32.mrf.mxu0
  %v539 = vadd.f32 %v370, %v538
  %v540 = vand.u32 %v280, 4294901760
  %541 = vmatmul.f32.gmra.mxu0 %v540
  %v542 = vpop.f32.mrf.mxu0
  %v543 = vadd.f32 %v378, %v542
  %v544 = vand.u32 %v283, 4294901760
  %545 = vmatmul.f32.gmra.mxu0 %v544
  %v546 = vpop.f32.mrf.mxu0
  %v547 = vadd.f32 %v386, %v546
  %v548 = vand.u32 %v286, 4294901760
  %549 = vmatmul.f32.gmra.mxu0 %v548
  %v550 = vpop.f32.mrf.mxu0
  %v551 = vadd.f32 %v394, %v550
  %v552 = vand.u32 %v289, 4294901760
  %553 = vmatmul.f32.gmra.mxu0 %v552
  %v554 = vpop.f32.mrf.mxu0
  %v555 = vadd.f32 %v402, %v554
  %v556 = vand.u32 %v292, 4294901760
  %557 = vmatmul.f32.gmra.mxu0 %v556
  %v558 = vpop.f32.mrf.mxu0
  %v559 = vadd.f32 %v410, %v558
  %v560 = vand.u32 %v295, 4294901760
  %561 = vmatmul.f32.gmra.mxu0 %v560
  %v562 = vpop.f32.mrf.mxu0
  %v563 = vadd.f32 %v418, %v562
  %v564 = vand.u32 %v298, 4294901760
  %565 = vmatmul.f32.gmra.mxu0 %v564
  %v566 = vpop.f32.mrf.mxu0
  %v567 = vadd.f32 %v426, %v566
  %v568 = vand.u32 %v301, 4294901760
  %569 = vmatmul.f32.gmra.mxu0 %v568
  %v570 = vpop.f32.mrf.mxu0
  %v571 = vadd.f32 %v434, %v570
  %v572 = vand.u32 %v304, 4294901760
  %573 = vmatmul.f32.gmra.mxu0 %v572
  %v574 = vpop.f32.mrf.mxu0
  %v575 = vadd.f32 %v442, %v574
  %v576 = vand.u32 %v307, 4294901760
  %577 = vmatmul.f32.gmra.mxu0 %v576
  %v578 = vpop.f32.mrf.mxu0
  %v579 = vadd.f32 %v450, %v578
  %v580 = vand.u32 %v310, 4294901760
  %581 = vmatmul.f32.gmra.mxu0 %v580
  %v582 = vpop.f32.mrf.mxu0
  %v583 = vadd.f32 %v458, %v582
  %v584 = vand.u32 %v313, 4294901760
  %585 = vmatmul.f32.gmra.mxu0 %v584
  %v586 = vpop.f32.mrf.mxu0
  %v587 = vadd.f32 %v466, %v586
  %588 = vdwg.mxu0
  %589 = vmatpush.msra.mxu0 0.0
  %590 = vmatpush.msra.mxu0 0.0
  %591 = vmatpush.msra.mxu0 0.0
  %592 = vmatpush.msra.mxu0 0.0
  %593 = vmatpush.msra.mxu0 0.0
  %594 = vmatpush.msra.mxu0 0.0
  %595 = vmatpush.msra.mxu0 0.0
  %596 = vmatpush.msra.mxu0 0.0
  %v597 = vand.u32 %v59, 4294901760
  %v598 = vsub.f32 %v59, %v597
  %599 = vmatpush.msra.mxu0 %v598
  %v600 = vand.u32 %v58, 4294901760
  %v601 = vsub.f32 %v58, %v600
  %602 = vmatpush.msra.mxu0 %v601
  %v603 = vand.u32 %v57, 4294901760
  %v604 = vsub.f32 %v57, %v603
  %605 = vmatpush.msra.mxu0 %v604
  %v606 = vand.u32 %v56, 4294901760
  %v607 = vsub.f32 %v56, %v606
  %608 = vmatpush.msra.mxu0 %v607
  %v609 = vand.u32 %v55, 4294901760
  %v610 = vsub.f32 %v55, %v609
  %611 = vmatpush.msra.mxu0 %v610
  %v612 = vand.u32 %v54, 4294901760
  %v613 = vsub.f32 %v54, %v612
  %614 = vmatpush.msra.mxu0 %v613
  %v615 = vand.u32 %v53, 4294901760
  %v616 = vsub.f32 %v53, %v615
  %617 = vmatpush.msra.mxu0 %v616
  %v618 = vand.u32 %v52, 4294901760
  %v619 = vsub.f32 %v52, %v618
  %620 = vmatpush.msra.mxu0 %v619
  %v621 = vand.u32 %v268, 4294901760
  %v622 = vsub.f32 %v268, %v621
  %623 = vmatmul.f32.gmra.mxu0 %v622
  %v624 = vpop.f32.mrf.mxu0
  %v625 = vadd.f32 %v527, %v624
  %v626 = vand.u32 %v271, 4294901760
  %v627 = vsub.f32 %v271, %v626
  %628 = vmatmul.f32.gmra.mxu0 %v627
  %v629 = vpop.f32.mrf.mxu0
  %v630 = vadd.f32 %v531, %v629
  %v631 = vand.u32 %v274, 4294901760
  %v632 = vsub.f32 %v274, %v631
  %633 = vmatmul.f32.gmra.mxu0 %v632
  %v634 = vpop.f32.mrf.mxu0
  %v635 = vadd.f32 %v535, %v634
  %v636 = vand.u32 %v277, 4294901760
  %v637 = vsub.f32 %v277, %v636
  %638 = vmatmul.f32.gmra.mxu0 %v637
  %v639 = vpop.f32.mrf.mxu0
  %v640 = vadd.f32 %v539, %v639
  %v641 = vand.u32 %v280, 4294901760
  %v642 = vsub.f32 %v280, %v641
  %643 = vmatmul.f32.gmra.mxu0 %v642
  %v644 = vpop.f32.mrf.mxu0
  %v645 = vadd.f32 %v543, %v644
  %v646 = vand.u32 %v283, 4294901760
  %v647 = vsub.f32 %v283, %v646
  %648 = vmatmul.f32.gmra.mxu0 %v647
  %v649 = vpop.f32.mrf.mxu0
  %v650 = vadd.f32 %v547, %v649
  %v651 = vand.u32 %v286, 4294901760
  %v652 = vsub.f32 %v286, %v651
  %653 = vmatmul.f32.gmra.mxu0 %v652
  %v654 = vpop.f32.mrf.mxu0
  %v655 = vadd.f32 %v551, %v654
  %v656 = vand.u32 %v289, 4294901760
  %v657 = vsub.f32 %v289, %v656
  %658 = vmatmul.f32.gmra.mxu0 %v657
  %v659 = vpop.f32.mrf.mxu0
  %v660 = vadd.f32 %v555, %v659
  %v661 = vand.u32 %v292, 4294901760
  %v662 = vsub.f32 %v292, %v661
  %663 = vmatmul.f32.gmra.mxu0 %v662
  %v664 = vpop.f32.mrf.mxu0
  %v665 = vadd.f32 %v559, %v664
  %v666 = vand.u32 %v295, 4294901760
  %v667 = vsub.f32 %v295, %v666
  %668 = vmatmul.f32.gmra.mxu0 %v667
  %v669 = vpop.f32.mrf.mxu0
  %v670 = vadd.f32 %v563, %v669
  %v671 = vand.u32 %v298, 4294901760
  %v672 = vsub.f32 %v298, %v671
  %673 = vmatmul.f32.gmra.mxu0 %v672
  %v674 = vpop.f32.mrf.mxu0
  %v675 = vadd.f32 %v567, %v674
  %v676 = vand.u32 %v301, 4294901760
  %v677 = vsub.f32 %v301, %v676
  %678 = vmatmul.f32.gmra.mxu0 %v677
  %v679 = vpop.f32.mrf.mxu0
  %v680 = vadd.f32 %v571, %v679
  %v681 = vand.u32 %v304, 4294901760
  %v682 = vsub.f32 %v304, %v681
  %683 = vmatmul.f32.gmra.mxu0 %v682
  %v684 = vpop.f32.mrf.mxu0
  %v685 = vadd.f32 %v575, %v684
  %v686 = vand.u32 %v307, 4294901760
  %v687 = vsub.f32 %v307, %v686
  %688 = vmatmul.f32.gmra.mxu0 %v687
  %v689 = vpop.f32.mrf.mxu0
  %v690 = vadd.f32 %v579, %v689
  %v691 = vand.u32 %v310, 4294901760
  %v692 = vsub.f32 %v310, %v691
  %693 = vmatmul.f32.gmra.mxu0 %v692
  %v694 = vpop.f32.mrf.mxu0
  %v695 = vadd.f32 %v583, %v694
  %v696 = vand.u32 %v313, 4294901760
  %v697 = vsub.f32 %v313, %v696
  %698 = vmatmul.f32.gmra.mxu0 %v697
  %v699 = vpop.f32.mrf.mxu0
  %v700 = vadd.f32 %v587, %v699
  %701 = vdwg.mxu0
  %702 = vmatpush.msra.mxu0 0.0
  %703 = vmatpush.msra.mxu0 0.0
  %704 = vmatpush.msra.mxu0 0.0
  %705 = vmatpush.msra.mxu0 0.0
  %706 = vmatpush.msra.mxu0 0.0
  %707 = vmatpush.msra.mxu0 0.0
  %708 = vmatpush.msra.mxu0 0.0
  %709 = vmatpush.msra.mxu0 0.0
  %v710 = vand.u32 %v59, 4294901760
  %711 = vmatpush.msra.mxu0 %v710
  %v712 = vand.u32 %v58, 4294901760
  %713 = vmatpush.msra.mxu0 %v712
  %v714 = vand.u32 %v57, 4294901760
  %715 = vmatpush.msra.mxu0 %v714
  %v716 = vand.u32 %v56, 4294901760
  %717 = vmatpush.msra.mxu0 %v716
  %v718 = vand.u32 %v55, 4294901760
  %719 = vmatpush.msra.mxu0 %v718
  %v720 = vand.u32 %v54, 4294901760
  %721 = vmatpush.msra.mxu0 %v720
  %v722 = vand.u32 %v53, 4294901760
  %723 = vmatpush.msra.mxu0 %v722
  %v724 = vand.u32 %v52, 4294901760
  %725 = vmatpush.msra.mxu0 %v724
  %v726 = vand.u32 %v268, 4294901760
  %v727 = vsub.f32 %v268, %v726
  %v728 = vand.u32 %v727, 4294901760
  %729 = vmatmul.f32.gmra.mxu0 %v728
  %v730 = vpop.f32.mrf.mxu0
  %v731 = vadd.f32 %v625, %v730
  %v732 = vand.u32 %v271, 4294901760
  %v733 = vsub.f32 %v271, %v732
  %v734 = vand.u32 %v733, 4294901760
  %735 = vmatmul.f32.gmra.mxu0 %v734
  %v736 = vpop.f32.mrf.mxu0
  %v737 = vadd.f32 %v630, %v736
  %v738 = vand.u32 %v274, 4294901760
  %v739 = vsub.f32 %v274, %v738
  %v740 = vand.u32 %v739, 4294901760
  %741 = vmatmul.f32.gmra.mxu0 %v740
  %v742 = vpop.f32.mrf.mxu0
  %v743 = vadd.f32 %v635, %v742
  %v744 = vand.u32 %v277, 4294901760
  %v745 = vsub.f32 %v277, %v744
  %v746 = vand.u32 %v745, 4294901760
  %747 = vmatmul.f32.gmra.mxu0 %v746
  %v748 = vpop.f32.mrf.mxu0
  %v749 = vadd.f32 %v640, %v748
  %v750 = vand.u32 %v280, 4294901760
  %v751 = vsub.f32 %v280, %v750
  %v752 = vand.u32 %v751, 4294901760
  %753 = vmatmul.f32.gmra.mxu0 %v752
  %v754 = vpop.f32.mrf.mxu0
  %v755 = vadd.f32 %v645, %v754
  %v756 = vand.u32 %v283, 4294901760
  %v757 = vsub.f32 %v283, %v756
  %v758 = vand.u32 %v757, 4294901760
  %759 = vmatmul.f32.gmra.mxu0 %v758
  %v760 = vpop.f32.mrf.mxu0
  %v761 = vadd.f32 %v650, %v760
  %v762 = vand.u32 %v286, 4294901760
  %v763 = vsub.f32 %v286, %v762
  %v764 = vand.u32 %v763, 4294901760
  %765 = vmatmul.f32.gmra.mxu0 %v764
  %v766 = vpop.f32.mrf.mxu0
  %v767 = vadd.f32 %v655, %v766
  %v768 = vand.u32 %v289, 4294901760
  %v769 = vsub.f32 %v289, %v768
  %v770 = vand.u32 %v769, 4294901760
  %771 = vmatmul.f32.gmra.mxu0 %v770
  %v772 = vpop.f32.mrf.mxu0
  %v773 = vadd.f32 %v660, %v772
  %v774 = vand.u32 %v292, 4294901760
  %v775 = vsub.f32 %v292, %v774
  %v776 = vand.u32 %v775, 4294901760
  %777 = vmatmul.f32.gmra.mxu0 %v776
  %v778 = vpop.f32.mrf.mxu0
  %v779 = vadd.f32 %v665, %v778
  %v780 = vand.u32 %v295, 4294901760
  %v781 = vsub.f32 %v295, %v780
  %v782 = vand.u32 %v781, 4294901760
  %783 = vmatmul.f32.gmra.mxu0 %v782
  %v784 = vpop.f32.mrf.mxu0
  %v785 = vadd.f32 %v670, %v784
  %v786 = vand.u32 %v298, 4294901760
  %v787 = vsub.f32 %v298, %v786
  %v788 = vand.u32 %v787, 4294901760
  %789 = vmatmul.f32.gmra.mxu0 %v788
  %v790 = vpop.f32.mrf.mxu0
  %v791 = vadd.f32 %v675, %v790
  %v792 = vand.u32 %v301, 4294901760
  %v793 = vsub.f32 %v301, %v792
  %v794 = vand.u32 %v793, 4294901760
  %795 = vmatmul.f32.gmra.mxu0 %v794
  %v796 = vpop.f32.mrf.mxu0
  %v797 = vadd.f32 %v680, %v796
  %v798 = vand.u32 %v304, 4294901760
  %v799 = vsub.f32 %v304, %v798
  %v800 = vand.u32 %v799, 4294901760
  %801 = vmatmul.f32.gmra.mxu0 %v800
  %v802 = vpop.f32.mrf.mxu0
  %v803 = vadd.f32 %v685, %v802
  %v804 = vand.u32 %v307, 4294901760
  %v805 = vsub.f32 %v307, %v804
  %v806 = vand.u32 %v805, 4294901760
  %807 = vmatmul.f32.gmra.mxu0 %v806
  %v808 = vpop.f32.mrf.mxu0
  %v809 = vadd.f32 %v690, %v808
  %v810 = vand.u32 %v310, 4294901760
  %v811 = vsub.f32 %v310, %v810
  %v812 = vand.u32 %v811, 4294901760
  %813 = vmatmul.f32.gmra.mxu0 %v812
  %v814 = vpop.f32.mrf.mxu0
  %v815 = vadd.f32 %v695, %v814
  %v816 = vand.u32 %v313, 4294901760
  %v817 = vsub.f32 %v313, %v816
  %v818 = vand.u32 %v817, 4294901760
  %819 = vmatmul.f32.gmra.mxu0 %v818
  %v820 = vpop.f32.mrf.mxu0
  %v821 = vadd.f32 %v700, %v820
  %822 = vdwg.mxu0
  %823 = vmatpush.msra.mxu0 0.0
  %824 = vmatpush.msra.mxu0 0.0
  %825 = vmatpush.msra.mxu0 0.0
  %826 = vmatpush.msra.mxu0 0.0
  %827 = vmatpush.msra.mxu0 0.0
  %828 = vmatpush.msra.mxu0 0.0
  %829 = vmatpush.msra.mxu0 0.0
  %830 = vmatpush.msra.mxu0 0.0
  %v831 = vand.u32 %v59, 4294901760
  %v832 = vsub.f32 %v59, %v831
  %v833 = vand.u32 %v832, 4294901760
  %834 = vmatpush.msra.mxu0 %v833
  %v835 = vand.u32 %v58, 4294901760
  %v836 = vsub.f32 %v58, %v835
  %v837 = vand.u32 %v836, 4294901760
  %838 = vmatpush.msra.mxu0 %v837
  %v839 = vand.u32 %v57, 4294901760
  %v840 = vsub.f32 %v57, %v839
  %v841 = vand.u32 %v840, 4294901760
  %842 = vmatpush.msra.mxu0 %v841
  %v843 = vand.u32 %v56, 4294901760
  %v844 = vsub.f32 %v56, %v843
  %v845 = vand.u32 %v844, 4294901760
  %846 = vmatpush.msra.mxu0 %v845
  %v847 = vand.u32 %v55, 4294901760
  %v848 = vsub.f32 %v55, %v847
  %v849 = vand.u32 %v848, 4294901760
  %850 = vmatpush.msra.mxu0 %v849
  %v851 = vand.u32 %v54, 4294901760
  %v852 = vsub.f32 %v54, %v851
  %v853 = vand.u32 %v852, 4294901760
  %854 = vmatpush.msra.mxu0 %v853
  %v855 = vand.u32 %v53, 4294901760
  %v856 = vsub.f32 %v53, %v855
  %v857 = vand.u32 %v856, 4294901760
  %858 = vmatpush.msra.mxu0 %v857
  %v859 = vand.u32 %v52, 4294901760
  %v860 = vsub.f32 %v52, %v859
  %v861 = vand.u32 %v860, 4294901760
  %862 = vmatpush.msra.mxu0 %v861
  %v863 = vand.u32 %v268, 4294901760
  %864 = vmatmul.f32.gmra.mxu0 %v863
  %v865 = vpop.f32.mrf.mxu0
  %v866 = vadd.f32 %v731, %v865
  %v867 = vand.u32 %v271, 4294901760
  %868 = vmatmul.f32.gmra.mxu0 %v867
  %v869 = vpop.f32.mrf.mxu0
  %v870 = vadd.f32 %v737, %v869
  %v871 = vand.u32 %v274, 4294901760
  %872 = vmatmul.f32.gmra.mxu0 %v871
  %v873 = vpop.f32.mrf.mxu0
  %v874 = vadd.f32 %v743, %v873
  %v875 = vand.u32 %v277, 4294901760
  %876 = vmatmul.f32.gmra.mxu0 %v875
  %v877 = vpop.f32.mrf.mxu0
  %v878 = vadd.f32 %v749, %v877
  %v879 = vand.u32 %v280, 4294901760
  %880 = vmatmul.f32.gmra.mxu0 %v879
  %v881 = vpop.f32.mrf.mxu0
  %v882 = vadd.f32 %v755, %v881
  %v883 = vand.u32 %v283, 4294901760
  %884 = vmatmul.f32.gmra.mxu0 %v883
  %v885 = vpop.f32.mrf.mxu0
  %v886 = vadd.f32 %v761, %v885
  %v887 = vand.u32 %v286, 4294901760
  %888 = vmatmul.f32.gmra.mxu0 %v887
  %v889 = vpop.f32.mrf.mxu0
  %v890 = vadd.f32 %v767, %v889
  %v891 = vand.u32 %v289, 4294901760
  %892 = vmatmul.f32.gmra.mxu0 %v891
  %v893 = vpop.f32.mrf.mxu0
  %v894 = vadd.f32 %v773, %v893
  %v895 = vand.u32 %v292, 4294901760
  %896 = vmatmul.f32.gmra.mxu0 %v895
  %v897 = vpop.f32.mrf.mxu0
  %v898 = vadd.f32 %v779, %v897
  %v899 = vand.u32 %v295, 4294901760
  %900 = vmatmul.f32.gmra.mxu0 %v899
  %v901 = vpop.f32.mrf.mxu0
  %v902 = vadd.f32 %v785, %v901
  %v903 = vand.u32 %v298, 4294901760
  %904 = vmatmul.f32.gmra.mxu0 %v903
  %v905 = vpop.f32.mrf.mxu0
  %v906 = vadd.f32 %v791, %v905
  %v907 = vand.u32 %v301, 4294901760
  %908 = vmatmul.f32.gmra.mxu0 %v907
  %v909 = vpop.f32.mrf.mxu0
  %v910 = vadd.f32 %v797, %v909
  %v911 = vand.u32 %v304, 4294901760
  %912 = vmatmul.f32.gmra.mxu0 %v911
  %v913 = vpop.f32.mrf.mxu0
  %v914 = vadd.f32 %v803, %v913
  %v915 = vand.u32 %v307, 4294901760
  %916 = vmatmul.f32.gmra.mxu0 %v915
  %v917 = vpop.f32.mrf.mxu0
  %v918 = vadd.f32 %v809, %v917
  %v919 = vand.u32 %v310, 4294901760
  %920 = vmatmul.f32.gmra.mxu0 %v919
  %v921 = vpop.f32.mrf.mxu0
  %v922 = vadd.f32 %v815, %v921
  %v923 = vand.u32 %v313, 4294901760
  %924 = vmatmul.f32.gmra.mxu0 %v923
  %v925 = vpop.f32.mrf.mxu0
  %v926 = vadd.f32 %v821, %v925
  %927 = vdwg.mxu0
  %928 = vmatpush.msra.mxu0 0.0
  %929 = vmatpush.msra.mxu0 0.0
  %930 = vmatpush.msra.mxu0 0.0
  %931 = vmatpush.msra.mxu0 0.0
  %932 = vmatpush.msra.mxu0 0.0
  %933 = vmatpush.msra.mxu0 0.0
  %934 = vmatpush.msra.mxu0 0.0
  %935 = vmatpush.msra.mxu0 0.0
  %v936 = vand.u32 %v59, 4294901760
  %937 = vmatpush.msra.mxu0 %v936
  %v938 = vand.u32 %v58, 4294901760
  %939 = vmatpush.msra.mxu0 %v938
  %v940 = vand.u32 %v57, 4294901760
  %941 = vmatpush.msra.mxu0 %v940
  %v942 = vand.u32 %v56, 4294901760
  %943 = vmatpush.msra.mxu0 %v942
  %v944 = vand.u32 %v55, 4294901760
  %945 = vmatpush.msra.mxu0 %v944
  %v946 = vand.u32 %v54, 4294901760
  %947 = vmatpush.msra.mxu0 %v946
  %v948 = vand.u32 %v53, 4294901760
  %949 = vmatpush.msra.mxu0 %v948
  %v950 = vand.u32 %v52, 4294901760
  %951 = vmatpush.msra.mxu0 %v950
  %v952 = vand.u32 %v268, 4294901760
  %953 = vmatmul.f32.gmra.mxu0 %v952
  %v954 = vpop.f32.mrf.mxu0
  %v955 = vadd.f32 %v866, %v954
  %v956 = vand.u32 %v271, 4294901760
  %957 = vmatmul.f32.gmra.mxu0 %v956
  %v958 = vpop.f32.mrf.mxu0
  %v959 = vadd.f32 %v870, %v958
  %v960 = vand.u32 %v274, 4294901760
  %961 = vmatmul.f32.gmra.mxu0 %v960
  %v962 = vpop.f32.mrf.mxu0
  %v963 = vadd.f32 %v874, %v962
  %v964 = vand.u32 %v277, 4294901760
  %965 = vmatmul.f32.gmra.mxu0 %v964
  %v966 = vpop.f32.mrf.mxu0
  %v967 = vadd.f32 %v878, %v966
  %v968 = vand.u32 %v280, 4294901760
  %969 = vmatmul.f32.gmra.mxu0 %v968
  %v970 = vpop.f32.mrf.mxu0
  %v971 = vadd.f32 %v882, %v970
  %v972 = vand.u32 %v283, 4294901760
  %973 = vmatmul.f32.gmra.mxu0 %v972
  %v974 = vpop.f32.mrf.mxu0
  %v975 = vadd.f32 %v886, %v974
  %v976 = vand.u32 %v286, 4294901760
  %977 = vmatmul.f32.gmra.mxu0 %v976
  %v978 = vpop.f32.mrf.mxu0
  %v979 = vadd.f32 %v890, %v978
  %v980 = vand.u32 %v289, 4294901760
  %981 = vmatmul.f32.gmra.mxu0 %v980
  %v982 = vpop.f32.mrf.mxu0
  %v983 = vadd.f32 %v894, %v982
  %v984 = vand.u32 %v292, 4294901760
  %985 = vmatmul.f32.gmra.mxu0 %v984
  %v986 = vpop.f32.mrf.mxu0
  %v987 = vadd.f32 %v898, %v986
  %v988 = vand.u32 %v295, 4294901760
  %989 = vmatmul.f32.gmra.mxu0 %v988
  %v990 = vpop.f32.mrf.mxu0
  %v991 = vadd.f32 %v902, %v990
  %v992 = vand.u32 %v298, 4294901760
  %993 = vmatmul.f32.gmra.mxu0 %v992
  %v994 = vpop.f32.mrf.mxu0
  %v995 = vadd.f32 %v906, %v994
  %v996 = vand.u32 %v301, 4294901760
  %997 = vmatmul.f32.gmra.mxu0 %v996
  %v998 = vpop.f32.mrf.mxu0
  %v999 = vadd.f32 %v910, %v998
  %v1000 = vand.u32 %v304, 4294901760
  %1001 = vmatmul.f32.gmra.mxu0 %v1000
  %v1002 = vpop.f32.mrf.mxu0
  %v1003 = vadd.f32 %v914, %v1002
  %v1004 = vand.u32 %v307, 4294901760
  %1005 = vmatmul.f32.gmra.mxu0 %v1004
  %v1006 = vpop.f32.mrf.mxu0
  %v1007 = vadd.f32 %v918, %v1006
  %v1008 = vand.u32 %v310, 4294901760
  %1009 = vmatmul.f32.gmra.mxu0 %v1008
  %v1010 = vpop.f32.mrf.mxu0
  %v1011 = vadd.f32 %v922, %v1010
  %v1012 = vand.u32 %v313, 4294901760
  %1013 = vmatmul.f32.gmra.mxu0 %v1012
  %v1014 = vpop.f32.mrf.mxu0
  %v1015 = vadd.f32 %v926, %v1014
  %1016 = vdwg.mxu0
  %vm1017 = vcmask 785408
  %v1019 = vsel %vm1017, %v250, 0
  %v1022 = vsel %vm1017, %v251, 0
  %v1025 = vsel %vm1017, %v252, 0
  %v1028 = vsel %vm1017, %v253, 0
  %v1031 = vsel %vm1017, %v254, 0
  %v1034 = vsel %vm1017, %v255, 0
  %v1037 = vsel %vm1017, %v256, 0
  %v1040 = vsel %vm1017, %v257, 0
  %v1043 = vsel %vm1017, %v258, 0
  %v1046 = vsel %vm1017, %v259, 0
  %v1049 = vsel %vm1017, %v260, 0
  %v1052 = vsel %vm1017, %v261, 0
  %v1055 = vsel %vm1017, %v262, 0
  %v1058 = vsel %vm1017, %v263, 0
  %v1061 = vsel %vm1017, %v264, 0
  %v1064 = vsel %vm1017, %v265, 0
  %1066 = vmatpush.msra.mxu0 0.0
  %1067 = vmatpush.msra.mxu0 0.0
  %1068 = vmatpush.msra.mxu0 0.0
  %1069 = vmatpush.msra.mxu0 0.0
  %v1070 = vand.u32 %v71, 4294901760
  %1071 = vmatpush.msra.mxu0 %v1070
  %v1072 = vand.u32 %v70, 4294901760
  %1073 = vmatpush.msra.mxu0 %v1072
  %v1074 = vand.u32 %v69, 4294901760
  %1075 = vmatpush.msra.mxu0 %v1074
  %v1076 = vand.u32 %v68, 4294901760
  %1077 = vmatpush.msra.mxu0 %v1076
  %v1078 = vand.u32 %v67, 4294901760
  %1079 = vmatpush.msra.mxu0 %v1078
  %v1080 = vand.u32 %v66, 4294901760
  %1081 = vmatpush.msra.mxu0 %v1080
  %v1082 = vand.u32 %v65, 4294901760
  %1083 = vmatpush.msra.mxu0 %v1082
  %v1084 = vand.u32 %v64, 4294901760
  %1085 = vmatpush.msra.mxu0 %v1084
  %v1086 = vand.u32 %v63, 4294901760
  %1087 = vmatpush.msra.mxu0 %v1086
  %v1088 = vand.u32 %v62, 4294901760
  %1089 = vmatpush.msra.mxu0 %v1088
  %v1090 = vand.u32 %v61, 4294901760
  %1091 = vmatpush.msra.mxu0 %v1090
  %v1092 = vand.u32 %v60, 4294901760
  %1093 = vmatpush.msra.mxu0 %v1092
  %v1094 = vand.u32 %v1019, 4294901760
  %v1095 = vsub.f32 %v1019, %v1094
  %v1096 = vand.u32 %v1095, 4294901760
  %v1097 = vsub.f32 %v1095, %v1096
  %v1098 = vand.u32 %v1097, 4294901760
  %1099 = vmatmul.f32.gmra.mxu0 %v1098
  %v1100 = vpop.f32.mrf.mxu0
  %v1101 = vadd.f32 0.0, %v1100
  %v1102 = vand.u32 %v1022, 4294901760
  %v1103 = vsub.f32 %v1022, %v1102
  %v1104 = vand.u32 %v1103, 4294901760
  %v1105 = vsub.f32 %v1103, %v1104
  %v1106 = vand.u32 %v1105, 4294901760
  %1107 = vmatmul.f32.gmra.mxu0 %v1106
  %v1108 = vpop.f32.mrf.mxu0
  %v1109 = vadd.f32 0.0, %v1108
  %v1110 = vand.u32 %v1025, 4294901760
  %v1111 = vsub.f32 %v1025, %v1110
  %v1112 = vand.u32 %v1111, 4294901760
  %v1113 = vsub.f32 %v1111, %v1112
  %v1114 = vand.u32 %v1113, 4294901760
  %1115 = vmatmul.f32.gmra.mxu0 %v1114
  %v1116 = vpop.f32.mrf.mxu0
  %v1117 = vadd.f32 0.0, %v1116
  %v1118 = vand.u32 %v1028, 4294901760
  %v1119 = vsub.f32 %v1028, %v1118
  %v1120 = vand.u32 %v1119, 4294901760
  %v1121 = vsub.f32 %v1119, %v1120
  %v1122 = vand.u32 %v1121, 4294901760
  %1123 = vmatmul.f32.gmra.mxu0 %v1122
  %v1124 = vpop.f32.mrf.mxu0
  %v1125 = vadd.f32 0.0, %v1124
  %v1126 = vand.u32 %v1031, 4294901760
  %v1127 = vsub.f32 %v1031, %v1126
  %v1128 = vand.u32 %v1127, 4294901760
  %v1129 = vsub.f32 %v1127, %v1128
  %v1130 = vand.u32 %v1129, 4294901760
  %1131 = vmatmul.f32.gmra.mxu0 %v1130
  %v1132 = vpop.f32.mrf.mxu0
  %v1133 = vadd.f32 0.0, %v1132
  %v1134 = vand.u32 %v1034, 4294901760
  %v1135 = vsub.f32 %v1034, %v1134
  %v1136 = vand.u32 %v1135, 4294901760
  %v1137 = vsub.f32 %v1135, %v1136
  %v1138 = vand.u32 %v1137, 4294901760
  %1139 = vmatmul.f32.gmra.mxu0 %v1138
  %v1140 = vpop.f32.mrf.mxu0
  %v1141 = vadd.f32 0.0, %v1140
  %v1142 = vand.u32 %v1037, 4294901760
  %v1143 = vsub.f32 %v1037, %v1142
  %v1144 = vand.u32 %v1143, 4294901760
  %v1145 = vsub.f32 %v1143, %v1144
  %v1146 = vand.u32 %v1145, 4294901760
  %1147 = vmatmul.f32.gmra.mxu0 %v1146
  %v1148 = vpop.f32.mrf.mxu0
  %v1149 = vadd.f32 0.0, %v1148
  %v1150 = vand.u32 %v1040, 4294901760
  %v1151 = vsub.f32 %v1040, %v1150
  %v1152 = vand.u32 %v1151, 4294901760
  %v1153 = vsub.f32 %v1151, %v1152
  %v1154 = vand.u32 %v1153, 4294901760
  %1155 = vmatmul.f32.gmra.mxu0 %v1154
  %v1156 = vpop.f32.mrf.mxu0
  %v1157 = vadd.f32 0.0, %v1156
  %v1158 = vand.u32 %v1043, 4294901760
  %v1159 = vsub.f32 %v1043, %v1158
  %v1160 = vand.u32 %v1159, 4294901760
  %v1161 = vsub.f32 %v1159, %v1160
  %v1162 = vand.u32 %v1161, 4294901760
  %1163 = vmatmul.f32.gmra.mxu0 %v1162
  %v1164 = vpop.f32.mrf.mxu0
  %v1165 = vadd.f32 0.0, %v1164
  %v1166 = vand.u32 %v1046, 4294901760
  %v1167 = vsub.f32 %v1046, %v1166
  %v1168 = vand.u32 %v1167, 4294901760
  %v1169 = vsub.f32 %v1167, %v1168
  %v1170 = vand.u32 %v1169, 4294901760
  %1171 = vmatmul.f32.gmra.mxu0 %v1170
  %v1172 = vpop.f32.mrf.mxu0
  %v1173 = vadd.f32 0.0, %v1172
  %v1174 = vand.u32 %v1049, 4294901760
  %v1175 = vsub.f32 %v1049, %v1174
  %v1176 = vand.u32 %v1175, 4294901760
  %v1177 = vsub.f32 %v1175, %v1176
  %v1178 = vand.u32 %v1177, 4294901760
  %1179 = vmatmul.f32.gmra.mxu0 %v1178
  %v1180 = vpop.f32.mrf.mxu0
  %v1181 = vadd.f32 0.0, %v1180
  %v1182 = vand.u32 %v1052, 4294901760
  %v1183 = vsub.f32 %v1052, %v1182
  %v1184 = vand.u32 %v1183, 4294901760
  %v1185 = vsub.f32 %v1183, %v1184
  %v1186 = vand.u32 %v1185, 4294901760
  %1187 = vmatmul.f32.gmra.mxu0 %v1186
  %v1188 = vpop.f32.mrf.mxu0
  %v1189 = vadd.f32 0.0, %v1188
  %v1190 = vand.u32 %v1055, 4294901760
  %v1191 = vsub.f32 %v1055, %v1190
  %v1192 = vand.u32 %v1191, 4294901760
  %v1193 = vsub.f32 %v1191, %v1192
  %v1194 = vand.u32 %v1193, 4294901760
  %1195 = vmatmul.f32.gmra.mxu0 %v1194
  %v1196 = vpop.f32.mrf.mxu0
  %v1197 = vadd.f32 0.0, %v1196
  %v1198 = vand.u32 %v1058, 4294901760
  %v1199 = vsub.f32 %v1058, %v1198
  %v1200 = vand.u32 %v1199, 4294901760
  %v1201 = vsub.f32 %v1199, %v1200
  %v1202 = vand.u32 %v1201, 4294901760
  %1203 = vmatmul.f32.gmra.mxu0 %v1202
  %v1204 = vpop.f32.mrf.mxu0
  %v1205 = vadd.f32 0.0, %v1204
  %v1206 = vand.u32 %v1061, 4294901760
  %v1207 = vsub.f32 %v1061, %v1206
  %v1208 = vand.u32 %v1207, 4294901760
  %v1209 = vsub.f32 %v1207, %v1208
  %v1210 = vand.u32 %v1209, 4294901760
  %1211 = vmatmul.f32.gmra.mxu0 %v1210
  %v1212 = vpop.f32.mrf.mxu0
  %v1213 = vadd.f32 0.0, %v1212
  %v1214 = vand.u32 %v1064, 4294901760
  %v1215 = vsub.f32 %v1064, %v1214
  %v1216 = vand.u32 %v1215, 4294901760
  %v1217 = vsub.f32 %v1215, %v1216
  %v1218 = vand.u32 %v1217, 4294901760
  %1219 = vmatmul.f32.gmra.mxu0 %v1218
  %v1220 = vpop.f32.mrf.mxu0
  %v1221 = vadd.f32 0.0, %v1220
  %1222 = vdwg.mxu0
  %1223 = vmatpush.msra.mxu0 0.0
  %1224 = vmatpush.msra.mxu0 0.0
  %1225 = vmatpush.msra.mxu0 0.0
  %1226 = vmatpush.msra.mxu0 0.0
  %v1227 = vand.u32 %v71, 4294901760
  %v1228 = vsub.f32 %v71, %v1227
  %v1229 = vand.u32 %v1228, 4294901760
  %v1230 = vsub.f32 %v1228, %v1229
  %v1231 = vand.u32 %v1230, 4294901760
  %1232 = vmatpush.msra.mxu0 %v1231
  %v1233 = vand.u32 %v70, 4294901760
  %v1234 = vsub.f32 %v70, %v1233
  %v1235 = vand.u32 %v1234, 4294901760
  %v1236 = vsub.f32 %v1234, %v1235
  %v1237 = vand.u32 %v1236, 4294901760
  %1238 = vmatpush.msra.mxu0 %v1237
  %v1239 = vand.u32 %v69, 4294901760
  %v1240 = vsub.f32 %v69, %v1239
  %v1241 = vand.u32 %v1240, 4294901760
  %v1242 = vsub.f32 %v1240, %v1241
  %v1243 = vand.u32 %v1242, 4294901760
  %1244 = vmatpush.msra.mxu0 %v1243
  %v1245 = vand.u32 %v68, 4294901760
  %v1246 = vsub.f32 %v68, %v1245
  %v1247 = vand.u32 %v1246, 4294901760
  %v1248 = vsub.f32 %v1246, %v1247
  %v1249 = vand.u32 %v1248, 4294901760
  %1250 = vmatpush.msra.mxu0 %v1249
  %v1251 = vand.u32 %v67, 4294901760
  %v1252 = vsub.f32 %v67, %v1251
  %v1253 = vand.u32 %v1252, 4294901760
  %v1254 = vsub.f32 %v1252, %v1253
  %v1255 = vand.u32 %v1254, 4294901760
  %1256 = vmatpush.msra.mxu0 %v1255
  %v1257 = vand.u32 %v66, 4294901760
  %v1258 = vsub.f32 %v66, %v1257
  %v1259 = vand.u32 %v1258, 4294901760
  %v1260 = vsub.f32 %v1258, %v1259
  %v1261 = vand.u32 %v1260, 4294901760
  %1262 = vmatpush.msra.mxu0 %v1261
  %v1263 = vand.u32 %v65, 4294901760
  %v1264 = vsub.f32 %v65, %v1263
  %v1265 = vand.u32 %v1264, 4294901760
  %v1266 = vsub.f32 %v1264, %v1265
  %v1267 = vand.u32 %v1266, 4294901760
  %1268 = vmatpush.msra.mxu0 %v1267
  %v1269 = vand.u32 %v64, 4294901760
  %v1270 = vsub.f32 %v64, %v1269
  %v1271 = vand.u32 %v1270, 4294901760
  %v1272 = vsub.f32 %v1270, %v1271
  %v1273 = vand.u32 %v1272, 4294901760
  %1274 = vmatpush.msra.mxu0 %v1273
  %v1275 = vand.u32 %v63, 4294901760
  %v1276 = vsub.f32 %v63, %v1275
  %v1277 = vand.u32 %v1276, 4294901760
  %v1278 = vsub.f32 %v1276, %v1277
  %v1279 = vand.u32 %v1278, 4294901760
  %1280 = vmatpush.msra.mxu0 %v1279
  %v1281 = vand.u32 %v62, 4294901760
  %v1282 = vsub.f32 %v62, %v1281
  %v1283 = vand.u32 %v1282, 4294901760
  %v1284 = vsub.f32 %v1282, %v1283
  %v1285 = vand.u32 %v1284, 4294901760
  %1286 = vmatpush.msra.mxu0 %v1285
  %v1287 = vand.u32 %v61, 4294901760
  %v1288 = vsub.f32 %v61, %v1287
  %v1289 = vand.u32 %v1288, 4294901760
  %v1290 = vsub.f32 %v1288, %v1289
  %v1291 = vand.u32 %v1290, 4294901760
  %1292 = vmatpush.msra.mxu0 %v1291
  %v1293 = vand.u32 %v60, 4294901760
  %v1294 = vsub.f32 %v60, %v1293
  %v1295 = vand.u32 %v1294, 4294901760
  %v1296 = vsub.f32 %v1294, %v1295
  %v1297 = vand.u32 %v1296, 4294901760
  %1298 = vmatpush.msra.mxu0 %v1297
  %v1299 = vand.u32 %v1019, 4294901760
  %1300 = vmatmul.f32.gmra.mxu0 %v1299
  %v1301 = vpop.f32.mrf.mxu0
  %v1302 = vadd.f32 %v1101, %v1301
  %v1303 = vand.u32 %v1022, 4294901760
  %1304 = vmatmul.f32.gmra.mxu0 %v1303
  %v1305 = vpop.f32.mrf.mxu0
  %v1306 = vadd.f32 %v1109, %v1305
  %v1307 = vand.u32 %v1025, 4294901760
  %1308 = vmatmul.f32.gmra.mxu0 %v1307
  %v1309 = vpop.f32.mrf.mxu0
  %v1310 = vadd.f32 %v1117, %v1309
  %v1311 = vand.u32 %v1028, 4294901760
  %1312 = vmatmul.f32.gmra.mxu0 %v1311
  %v1313 = vpop.f32.mrf.mxu0
  %v1314 = vadd.f32 %v1125, %v1313
  %v1315 = vand.u32 %v1031, 4294901760
  %1316 = vmatmul.f32.gmra.mxu0 %v1315
  %v1317 = vpop.f32.mrf.mxu0
  %v1318 = vadd.f32 %v1133, %v1317
  %v1319 = vand.u32 %v1034, 4294901760
  %1320 = vmatmul.f32.gmra.mxu0 %v1319
  %v1321 = vpop.f32.mrf.mxu0
  %v1322 = vadd.f32 %v1141, %v1321
  %v1323 = vand.u32 %v1037, 4294901760
  %1324 = vmatmul.f32.gmra.mxu0 %v1323
  %v1325 = vpop.f32.mrf.mxu0
  %v1326 = vadd.f32 %v1149, %v1325
  %v1327 = vand.u32 %v1040, 4294901760
  %1328 = vmatmul.f32.gmra.mxu0 %v1327
  %v1329 = vpop.f32.mrf.mxu0
  %v1330 = vadd.f32 %v1157, %v1329
  %v1331 = vand.u32 %v1043, 4294901760
  %1332 = vmatmul.f32.gmra.mxu0 %v1331
  %v1333 = vpop.f32.mrf.mxu0
  %v1334 = vadd.f32 %v1165, %v1333
  %v1335 = vand.u32 %v1046, 4294901760
  %1336 = vmatmul.f32.gmra.mxu0 %v1335
  %v1337 = vpop.f32.mrf.mxu0
  %v1338 = vadd.f32 %v1173, %v1337
  %v1339 = vand.u32 %v1049, 4294901760
  %1340 = vmatmul.f32.gmra.mxu0 %v1339
  %v1341 = vpop.f32.mrf.mxu0
  %v1342 = vadd.f32 %v1181, %v1341
  %v1343 = vand.u32 %v1052, 4294901760
  %1344 = vmatmul.f32.gmra.mxu0 %v1343
  %v1345 = vpop.f32.mrf.mxu0
  %v1346 = vadd.f32 %v1189, %v1345
  %v1347 = vand.u32 %v1055, 4294901760
  %1348 = vmatmul.f32.gmra.mxu0 %v1347
  %v1349 = vpop.f32.mrf.mxu0
  %v1350 = vadd.f32 %v1197, %v1349
  %v1351 = vand.u32 %v1058, 4294901760
  %1352 = vmatmul.f32.gmra.mxu0 %v1351
  %v1353 = vpop.f32.mrf.mxu0
  %v1354 = vadd.f32 %v1205, %v1353
  %v1355 = vand.u32 %v1061, 4294901760
  %1356 = vmatmul.f32.gmra.mxu0 %v1355
  %v1357 = vpop.f32.mrf.mxu0
  %v1358 = vadd.f32 %v1213, %v1357
  %v1359 = vand.u32 %v1064, 4294901760
  %1360 = vmatmul.f32.gmra.mxu0 %v1359
  %v1361 = vpop.f32.mrf.mxu0
  %v1362 = vadd.f32 %v1221, %v1361
  %1363 = vdwg.mxu0
  %1364 = vmatpush.msra.mxu0 0.0
  %1365 = vmatpush.msra.mxu0 0.0
  %1366 = vmatpush.msra.mxu0 0.0
  %1367 = vmatpush.msra.mxu0 0.0
  %v1368 = vand.u32 %v71, 4294901760
  %v1369 = vsub.f32 %v71, %v1368
  %1370 = vmatpush.msra.mxu0 %v1369
  %v1371 = vand.u32 %v70, 4294901760
  %v1372 = vsub.f32 %v70, %v1371
  %1373 = vmatpush.msra.mxu0 %v1372
  %v1374 = vand.u32 %v69, 4294901760
  %v1375 = vsub.f32 %v69, %v1374
  %1376 = vmatpush.msra.mxu0 %v1375
  %v1377 = vand.u32 %v68, 4294901760
  %v1378 = vsub.f32 %v68, %v1377
  %1379 = vmatpush.msra.mxu0 %v1378
  %v1380 = vand.u32 %v67, 4294901760
  %v1381 = vsub.f32 %v67, %v1380
  %1382 = vmatpush.msra.mxu0 %v1381
  %v1383 = vand.u32 %v66, 4294901760
  %v1384 = vsub.f32 %v66, %v1383
  %1385 = vmatpush.msra.mxu0 %v1384
  %v1386 = vand.u32 %v65, 4294901760
  %v1387 = vsub.f32 %v65, %v1386
  %1388 = vmatpush.msra.mxu0 %v1387
  %v1389 = vand.u32 %v64, 4294901760
  %v1390 = vsub.f32 %v64, %v1389
  %1391 = vmatpush.msra.mxu0 %v1390
  %v1392 = vand.u32 %v63, 4294901760
  %v1393 = vsub.f32 %v63, %v1392
  %1394 = vmatpush.msra.mxu0 %v1393
  %v1395 = vand.u32 %v62, 4294901760
  %v1396 = vsub.f32 %v62, %v1395
  %1397 = vmatpush.msra.mxu0 %v1396
  %v1398 = vand.u32 %v61, 4294901760
  %v1399 = vsub.f32 %v61, %v1398
  %1400 = vmatpush.msra.mxu0 %v1399
  %v1401 = vand.u32 %v60, 4294901760
  %v1402 = vsub.f32 %v60, %v1401
  %1403 = vmatpush.msra.mxu0 %v1402
  %v1404 = vand.u32 %v1019, 4294901760
  %v1405 = vsub.f32 %v1019, %v1404
  %1406 = vmatmul.f32.gmra.mxu0 %v1405
  %v1407 = vpop.f32.mrf.mxu0
  %v1408 = vadd.f32 %v1302, %v1407
  %v1409 = vand.u32 %v1022, 4294901760
  %v1410 = vsub.f32 %v1022, %v1409
  %1411 = vmatmul.f32.gmra.mxu0 %v1410
  %v1412 = vpop.f32.mrf.mxu0
  %v1413 = vadd.f32 %v1306, %v1412
  %v1414 = vand.u32 %v1025, 4294901760
  %v1415 = vsub.f32 %v1025, %v1414
  %1416 = vmatmul.f32.gmra.mxu0 %v1415
  %v1417 = vpop.f32.mrf.mxu0
  %v1418 = vadd.f32 %v1310, %v1417
  %v1419 = vand.u32 %v1028, 4294901760
  %v1420 = vsub.f32 %v1028, %v1419
  %1421 = vmatmul.f32.gmra.mxu0 %v1420
  %v1422 = vpop.f32.mrf.mxu0
  %v1423 = vadd.f32 %v1314, %v1422
  %v1424 = vand.u32 %v1031, 4294901760
  %v1425 = vsub.f32 %v1031, %v1424
  %1426 = vmatmul.f32.gmra.mxu0 %v1425
  %v1427 = vpop.f32.mrf.mxu0
  %v1428 = vadd.f32 %v1318, %v1427
  %v1429 = vand.u32 %v1034, 4294901760
  %v1430 = vsub.f32 %v1034, %v1429
  %1431 = vmatmul.f32.gmra.mxu0 %v1430
  %v1432 = vpop.f32.mrf.mxu0
  %v1433 = vadd.f32 %v1322, %v1432
  %v1434 = vand.u32 %v1037, 4294901760
  %v1435 = vsub.f32 %v1037, %v1434
  %1436 = vmatmul.f32.gmra.mxu0 %v1435
  %v1437 = vpop.f32.mrf.mxu0
  %v1438 = vadd.f32 %v1326, %v1437
  %v1439 = vand.u32 %v1040, 4294901760
  %v1440 = vsub.f32 %v1040, %v1439
  %1441 = vmatmul.f32.gmra.mxu0 %v1440
  %v1442 = vpop.f32.mrf.mxu0
  %v1443 = vadd.f32 %v1330, %v1442
  %v1444 = vand.u32 %v1043, 4294901760
  %v1445 = vsub.f32 %v1043, %v1444
  %1446 = vmatmul.f32.gmra.mxu0 %v1445
  %v1447 = vpop.f32.mrf.mxu0
  %v1448 = vadd.f32 %v1334, %v1447
  %v1449 = vand.u32 %v1046, 4294901760
  %v1450 = vsub.f32 %v1046, %v1449
  %1451 = vmatmul.f32.gmra.mxu0 %v1450
  %v1452 = vpop.f32.mrf.mxu0
  %v1453 = vadd.f32 %v1338, %v1452
  %v1454 = vand.u32 %v1049, 4294901760
  %v1455 = vsub.f32 %v1049, %v1454
  %1456 = vmatmul.f32.gmra.mxu0 %v1455
  %v1457 = vpop.f32.mrf.mxu0
  %v1458 = vadd.f32 %v1342, %v1457
  %v1459 = vand.u32 %v1052, 4294901760
  %v1460 = vsub.f32 %v1052, %v1459
  %1461 = vmatmul.f32.gmra.mxu0 %v1460
  %v1462 = vpop.f32.mrf.mxu0
  %v1463 = vadd.f32 %v1346, %v1462
  %v1464 = vand.u32 %v1055, 4294901760
  %v1465 = vsub.f32 %v1055, %v1464
  %1466 = vmatmul.f32.gmra.mxu0 %v1465
  %v1467 = vpop.f32.mrf.mxu0
  %v1468 = vadd.f32 %v1350, %v1467
  %v1469 = vand.u32 %v1058, 4294901760
  %v1470 = vsub.f32 %v1058, %v1469
  %1471 = vmatmul.f32.gmra.mxu0 %v1470
  %v1472 = vpop.f32.mrf.mxu0
  %v1473 = vadd.f32 %v1354, %v1472
  %v1474 = vand.u32 %v1061, 4294901760
  %v1475 = vsub.f32 %v1061, %v1474
  %1476 = vmatmul.f32.gmra.mxu0 %v1475
  %v1477 = vpop.f32.mrf.mxu0
  %v1478 = vadd.f32 %v1358, %v1477
  %v1479 = vand.u32 %v1064, 4294901760
  %v1480 = vsub.f32 %v1064, %v1479
  %1481 = vmatmul.f32.gmra.mxu0 %v1480
  %v1482 = vpop.f32.mrf.mxu0
  %v1483 = vadd.f32 %v1362, %v1482
  %1484 = vdwg.mxu0
  %1485 = vmatpush.msra.mxu0 0.0
  %1486 = vmatpush.msra.mxu0 0.0
  %1487 = vmatpush.msra.mxu0 0.0
  %1488 = vmatpush.msra.mxu0 0.0
  %v1489 = vand.u32 %v71, 4294901760
  %1490 = vmatpush.msra.mxu0 %v1489
  %v1491 = vand.u32 %v70, 4294901760
  %1492 = vmatpush.msra.mxu0 %v1491
  %v1493 = vand.u32 %v69, 4294901760
  %1494 = vmatpush.msra.mxu0 %v1493
  %v1495 = vand.u32 %v68, 4294901760
  %1496 = vmatpush.msra.mxu0 %v1495
  %v1497 = vand.u32 %v67, 4294901760
  %1498 = vmatpush.msra.mxu0 %v1497
  %v1499 = vand.u32 %v66, 4294901760
  %1500 = vmatpush.msra.mxu0 %v1499
  %v1501 = vand.u32 %v65, 4294901760
  %1502 = vmatpush.msra.mxu0 %v1501
  %v1503 = vand.u32 %v64, 4294901760
  %1504 = vmatpush.msra.mxu0 %v1503
  %v1505 = vand.u32 %v63, 4294901760
  %1506 = vmatpush.msra.mxu0 %v1505
  %v1507 = vand.u32 %v62, 4294901760
  %1508 = vmatpush.msra.mxu0 %v1507
  %v1509 = vand.u32 %v61, 4294901760
  %1510 = vmatpush.msra.mxu0 %v1509
  %v1511 = vand.u32 %v60, 4294901760
  %1512 = vmatpush.msra.mxu0 %v1511
  %v1513 = vand.u32 %v1019, 4294901760
  %v1514 = vsub.f32 %v1019, %v1513
  %v1515 = vand.u32 %v1514, 4294901760
  %1516 = vmatmul.f32.gmra.mxu0 %v1515
  %v1517 = vpop.f32.mrf.mxu0
  %v1518 = vadd.f32 %v1408, %v1517
  %v1519 = vand.u32 %v1022, 4294901760
  %v1520 = vsub.f32 %v1022, %v1519
  %v1521 = vand.u32 %v1520, 4294901760
  %1522 = vmatmul.f32.gmra.mxu0 %v1521
  %v1523 = vpop.f32.mrf.mxu0
  %v1524 = vadd.f32 %v1413, %v1523
  %v1525 = vand.u32 %v1025, 4294901760
  %v1526 = vsub.f32 %v1025, %v1525
  %v1527 = vand.u32 %v1526, 4294901760
  %1528 = vmatmul.f32.gmra.mxu0 %v1527
  %v1529 = vpop.f32.mrf.mxu0
  %v1530 = vadd.f32 %v1418, %v1529
  %v1531 = vand.u32 %v1028, 4294901760
  %v1532 = vsub.f32 %v1028, %v1531
  %v1533 = vand.u32 %v1532, 4294901760
  %1534 = vmatmul.f32.gmra.mxu0 %v1533
  %v1535 = vpop.f32.mrf.mxu0
  %v1536 = vadd.f32 %v1423, %v1535
  %v1537 = vand.u32 %v1031, 4294901760
  %v1538 = vsub.f32 %v1031, %v1537
  %v1539 = vand.u32 %v1538, 4294901760
  %1540 = vmatmul.f32.gmra.mxu0 %v1539
  %v1541 = vpop.f32.mrf.mxu0
  %v1542 = vadd.f32 %v1428, %v1541
  %v1543 = vand.u32 %v1034, 4294901760
  %v1544 = vsub.f32 %v1034, %v1543
  %v1545 = vand.u32 %v1544, 4294901760
  %1546 = vmatmul.f32.gmra.mxu0 %v1545
  %v1547 = vpop.f32.mrf.mxu0
  %v1548 = vadd.f32 %v1433, %v1547
  %v1549 = vand.u32 %v1037, 4294901760
  %v1550 = vsub.f32 %v1037, %v1549
  %v1551 = vand.u32 %v1550, 4294901760
  %1552 = vmatmul.f32.gmra.mxu0 %v1551
  %v1553 = vpop.f32.mrf.mxu0
  %v1554 = vadd.f32 %v1438, %v1553
  %v1555 = vand.u32 %v1040, 4294901760
  %v1556 = vsub.f32 %v1040, %v1555
  %v1557 = vand.u32 %v1556, 4294901760
  %1558 = vmatmul.f32.gmra.mxu0 %v1557
  %v1559 = vpop.f32.mrf.mxu0
  %v1560 = vadd.f32 %v1443, %v1559
  %v1561 = vand.u32 %v1043, 4294901760
  %v1562 = vsub.f32 %v1043, %v1561
  %v1563 = vand.u32 %v1562, 4294901760
  %1564 = vmatmul.f32.gmra.mxu0 %v1563
  %v1565 = vpop.f32.mrf.mxu0
  %v1566 = vadd.f32 %v1448, %v1565
  %v1567 = vand.u32 %v1046, 4294901760
  %v1568 = vsub.f32 %v1046, %v1567
  %v1569 = vand.u32 %v1568, 4294901760
  %1570 = vmatmul.f32.gmra.mxu0 %v1569
  %v1571 = vpop.f32.mrf.mxu0
  %v1572 = vadd.f32 %v1453, %v1571
  %v1573 = vand.u32 %v1049, 4294901760
  %v1574 = vsub.f32 %v1049, %v1573
  %v1575 = vand.u32 %v1574, 4294901760
  %1576 = vmatmul.f32.gmra.mxu0 %v1575
  %v1577 = vpop.f32.mrf.mxu0
  %v1578 = vadd.f32 %v1458, %v1577
  %v1579 = vand.u32 %v1052, 4294901760
  %v1580 = vsub.f32 %v1052, %v1579
  %v1581 = vand.u32 %v1580, 4294901760
  %1582 = vmatmul.f32.gmra.mxu0 %v1581
  %v1583 = vpop.f32.mrf.mxu0
  %v1584 = vadd.f32 %v1463, %v1583
  %v1585 = vand.u32 %v1055, 4294901760
  %v1586 = vsub.f32 %v1055, %v1585
  %v1587 = vand.u32 %v1586, 4294901760
  %1588 = vmatmul.f32.gmra.mxu0 %v1587
  %v1589 = vpop.f32.mrf.mxu0
  %v1590 = vadd.f32 %v1468, %v1589
  %v1591 = vand.u32 %v1058, 4294901760
  %v1592 = vsub.f32 %v1058, %v1591
  %v1593 = vand.u32 %v1592, 4294901760
  %1594 = vmatmul.f32.gmra.mxu0 %v1593
  %v1595 = vpop.f32.mrf.mxu0
  %v1596 = vadd.f32 %v1473, %v1595
  %v1597 = vand.u32 %v1061, 4294901760
  %v1598 = vsub.f32 %v1061, %v1597
  %v1599 = vand.u32 %v1598, 4294901760
  %1600 = vmatmul.f32.gmra.mxu0 %v1599
  %v1601 = vpop.f32.mrf.mxu0
  %v1602 = vadd.f32 %v1478, %v1601
  %v1603 = vand.u32 %v1064, 4294901760
  %v1604 = vsub.f32 %v1064, %v1603
  %v1605 = vand.u32 %v1604, 4294901760
  %1606 = vmatmul.f32.gmra.mxu0 %v1605
  %v1607 = vpop.f32.mrf.mxu0
  %v1608 = vadd.f32 %v1483, %v1607
  %1609 = vdwg.mxu0
  %1610 = vmatpush.msra.mxu0 0.0
  %1611 = vmatpush.msra.mxu0 0.0
  %1612 = vmatpush.msra.mxu0 0.0
  %1613 = vmatpush.msra.mxu0 0.0
  %v1614 = vand.u32 %v71, 4294901760
  %v1615 = vsub.f32 %v71, %v1614
  %v1616 = vand.u32 %v1615, 4294901760
  %1617 = vmatpush.msra.mxu0 %v1616
  %v1618 = vand.u32 %v70, 4294901760
  %v1619 = vsub.f32 %v70, %v1618
  %v1620 = vand.u32 %v1619, 4294901760
  %1621 = vmatpush.msra.mxu0 %v1620
  %v1622 = vand.u32 %v69, 4294901760
  %v1623 = vsub.f32 %v69, %v1622
  %v1624 = vand.u32 %v1623, 4294901760
  %1625 = vmatpush.msra.mxu0 %v1624
  %v1626 = vand.u32 %v68, 4294901760
  %v1627 = vsub.f32 %v68, %v1626
  %v1628 = vand.u32 %v1627, 4294901760
  %1629 = vmatpush.msra.mxu0 %v1628
  %v1630 = vand.u32 %v67, 4294901760
  %v1631 = vsub.f32 %v67, %v1630
  %v1632 = vand.u32 %v1631, 4294901760
  %1633 = vmatpush.msra.mxu0 %v1632
  %v1634 = vand.u32 %v66, 4294901760
  %v1635 = vsub.f32 %v66, %v1634
  %v1636 = vand.u32 %v1635, 4294901760
  %1637 = vmatpush.msra.mxu0 %v1636
  %v1638 = vand.u32 %v65, 4294901760
  %v1639 = vsub.f32 %v65, %v1638
  %v1640 = vand.u32 %v1639, 4294901760
  %1641 = vmatpush.msra.mxu0 %v1640
  %v1642 = vand.u32 %v64, 4294901760
  %v1643 = vsub.f32 %v64, %v1642
  %v1644 = vand.u32 %v1643, 4294901760
  %1645 = vmatpush.msra.mxu0 %v1644
  %v1646 = vand.u32 %v63, 4294901760
  %v1647 = vsub.f32 %v63, %v1646
  %v1648 = vand.u32 %v1647, 4294901760
  %1649 = vmatpush.msra.mxu0 %v1648
  %v1650 = vand.u32 %v62, 4294901760
  %v1651 = vsub.f32 %v62, %v1650
  %v1652 = vand.u32 %v1651, 4294901760
  %1653 = vmatpush.msra.mxu0 %v1652
  %v1654 = vand.u32 %v61, 4294901760
  %v1655 = vsub.f32 %v61, %v1654
  %v1656 = vand.u32 %v1655, 4294901760
  %1657 = vmatpush.msra.mxu0 %v1656
  %v1658 = vand.u32 %v60, 4294901760
  %v1659 = vsub.f32 %v60, %v1658
  %v1660 = vand.u32 %v1659, 4294901760
  %1661 = vmatpush.msra.mxu0 %v1660
  %v1662 = vand.u32 %v1019, 4294901760
  %1663 = vmatmul.f32.gmra.mxu0 %v1662
  %v1664 = vpop.f32.mrf.mxu0
  %v1665 = vadd.f32 %v1518, %v1664
  %v1666 = vand.u32 %v1022, 4294901760
  %1667 = vmatmul.f32.gmra.mxu0 %v1666
  %v1668 = vpop.f32.mrf.mxu0
  %v1669 = vadd.f32 %v1524, %v1668
  %v1670 = vand.u32 %v1025, 4294901760
  %1671 = vmatmul.f32.gmra.mxu0 %v1670
  %v1672 = vpop.f32.mrf.mxu0
  %v1673 = vadd.f32 %v1530, %v1672
  %v1674 = vand.u32 %v1028, 4294901760
  %1675 = vmatmul.f32.gmra.mxu0 %v1674
  %v1676 = vpop.f32.mrf.mxu0
  %v1677 = vadd.f32 %v1536, %v1676
  %v1678 = vand.u32 %v1031, 4294901760
  %1679 = vmatmul.f32.gmra.mxu0 %v1678
  %v1680 = vpop.f32.mrf.mxu0
  %v1681 = vadd.f32 %v1542, %v1680
  %v1682 = vand.u32 %v1034, 4294901760
  %1683 = vmatmul.f32.gmra.mxu0 %v1682
  %v1684 = vpop.f32.mrf.mxu0
  %v1685 = vadd.f32 %v1548, %v1684
  %v1686 = vand.u32 %v1037, 4294901760
  %1687 = vmatmul.f32.gmra.mxu0 %v1686
  %v1688 = vpop.f32.mrf.mxu0
  %v1689 = vadd.f32 %v1554, %v1688
  %v1690 = vand.u32 %v1040, 4294901760
  %1691 = vmatmul.f32.gmra.mxu0 %v1690
  %v1692 = vpop.f32.mrf.mxu0
  %v1693 = vadd.f32 %v1560, %v1692
  %v1694 = vand.u32 %v1043, 4294901760
  %1695 = vmatmul.f32.gmra.mxu0 %v1694
  %v1696 = vpop.f32.mrf.mxu0
  %v1697 = vadd.f32 %v1566, %v1696
  %v1698 = vand.u32 %v1046, 4294901760
  %1699 = vmatmul.f32.gmra.mxu0 %v1698
  %v1700 = vpop.f32.mrf.mxu0
  %v1701 = vadd.f32 %v1572, %v1700
  %v1702 = vand.u32 %v1049, 4294901760
  %1703 = vmatmul.f32.gmra.mxu0 %v1702
  %v1704 = vpop.f32.mrf.mxu0
  %v1705 = vadd.f32 %v1578, %v1704
  %v1706 = vand.u32 %v1052, 4294901760
  %1707 = vmatmul.f32.gmra.mxu0 %v1706
  %v1708 = vpop.f32.mrf.mxu0
  %v1709 = vadd.f32 %v1584, %v1708
  %v1710 = vand.u32 %v1055, 4294901760
  %1711 = vmatmul.f32.gmra.mxu0 %v1710
  %v1712 = vpop.f32.mrf.mxu0
  %v1713 = vadd.f32 %v1590, %v1712
  %v1714 = vand.u32 %v1058, 4294901760
  %1715 = vmatmul.f32.gmra.mxu0 %v1714
  %v1716 = vpop.f32.mrf.mxu0
  %v1717 = vadd.f32 %v1596, %v1716
  %v1718 = vand.u32 %v1061, 4294901760
  %1719 = vmatmul.f32.gmra.mxu0 %v1718
  %v1720 = vpop.f32.mrf.mxu0
  %v1721 = vadd.f32 %v1602, %v1720
  %v1722 = vand.u32 %v1064, 4294901760
  %1723 = vmatmul.f32.gmra.mxu0 %v1722
  %v1724 = vpop.f32.mrf.mxu0
  %v1725 = vadd.f32 %v1608, %v1724
  %1726 = vdwg.mxu0
  %1727 = vmatpush.msra.mxu0 0.0
  %1728 = vmatpush.msra.mxu0 0.0
  %1729 = vmatpush.msra.mxu0 0.0
  %1730 = vmatpush.msra.mxu0 0.0
  %v1731 = vand.u32 %v71, 4294901760
  %1732 = vmatpush.msra.mxu0 %v1731
  %v1733 = vand.u32 %v70, 4294901760
  %1734 = vmatpush.msra.mxu0 %v1733
  %v1735 = vand.u32 %v69, 4294901760
  %1736 = vmatpush.msra.mxu0 %v1735
  %v1737 = vand.u32 %v68, 4294901760
  %1738 = vmatpush.msra.mxu0 %v1737
  %v1739 = vand.u32 %v67, 4294901760
  %1740 = vmatpush.msra.mxu0 %v1739
  %v1741 = vand.u32 %v66, 4294901760
  %1742 = vmatpush.msra.mxu0 %v1741
  %v1743 = vand.u32 %v65, 4294901760
  %1744 = vmatpush.msra.mxu0 %v1743
  %v1745 = vand.u32 %v64, 4294901760
  %1746 = vmatpush.msra.mxu0 %v1745
  %v1747 = vand.u32 %v63, 4294901760
  %1748 = vmatpush.msra.mxu0 %v1747
  %v1749 = vand.u32 %v62, 4294901760
  %1750 = vmatpush.msra.mxu0 %v1749
  %v1751 = vand.u32 %v61, 4294901760
  %1752 = vmatpush.msra.mxu0 %v1751
  %v1753 = vand.u32 %v60, 4294901760
  %1754 = vmatpush.msra.mxu0 %v1753
  %v1755 = vand.u32 %v1019, 4294901760
  %1756 = vmatmul.f32.gmra.mxu0 %v1755
  %v1757 = vpop.f32.mrf.mxu0
  %v1758 = vadd.f32 %v1665, %v1757
  %v1759 = vand.u32 %v1022, 4294901760
  %1760 = vmatmul.f32.gmra.mxu0 %v1759
  %v1761 = vpop.f32.mrf.mxu0
  %v1762 = vadd.f32 %v1669, %v1761
  %v1763 = vand.u32 %v1025, 4294901760
  %1764 = vmatmul.f32.gmra.mxu0 %v1763
  %v1765 = vpop.f32.mrf.mxu0
  %v1766 = vadd.f32 %v1673, %v1765
  %v1767 = vand.u32 %v1028, 4294901760
  %1768 = vmatmul.f32.gmra.mxu0 %v1767
  %v1769 = vpop.f32.mrf.mxu0
  %v1770 = vadd.f32 %v1677, %v1769
  %v1771 = vand.u32 %v1031, 4294901760
  %1772 = vmatmul.f32.gmra.mxu0 %v1771
  %v1773 = vpop.f32.mrf.mxu0
  %v1774 = vadd.f32 %v1681, %v1773
  %v1775 = vand.u32 %v1034, 4294901760
  %1776 = vmatmul.f32.gmra.mxu0 %v1775
  %v1777 = vpop.f32.mrf.mxu0
  %v1778 = vadd.f32 %v1685, %v1777
  %v1779 = vand.u32 %v1037, 4294901760
  %1780 = vmatmul.f32.gmra.mxu0 %v1779
  %v1781 = vpop.f32.mrf.mxu0
  %v1782 = vadd.f32 %v1689, %v1781
  %v1783 = vand.u32 %v1040, 4294901760
  %1784 = vmatmul.f32.gmra.mxu0 %v1783
  %v1785 = vpop.f32.mrf.mxu0
  %v1786 = vadd.f32 %v1693, %v1785
  %v1787 = vand.u32 %v1043, 4294901760
  %1788 = vmatmul.f32.gmra.mxu0 %v1787
  %v1789 = vpop.f32.mrf.mxu0
  %v1790 = vadd.f32 %v1697, %v1789
  %v1791 = vand.u32 %v1046, 4294901760
  %1792 = vmatmul.f32.gmra.mxu0 %v1791
  %v1793 = vpop.f32.mrf.mxu0
  %v1794 = vadd.f32 %v1701, %v1793
  %v1795 = vand.u32 %v1049, 4294901760
  %1796 = vmatmul.f32.gmra.mxu0 %v1795
  %v1797 = vpop.f32.mrf.mxu0
  %v1798 = vadd.f32 %v1705, %v1797
  %v1799 = vand.u32 %v1052, 4294901760
  %1800 = vmatmul.f32.gmra.mxu0 %v1799
  %v1801 = vpop.f32.mrf.mxu0
  %v1802 = vadd.f32 %v1709, %v1801
  %v1803 = vand.u32 %v1055, 4294901760
  %1804 = vmatmul.f32.gmra.mxu0 %v1803
  %v1805 = vpop.f32.mrf.mxu0
  %v1806 = vadd.f32 %v1713, %v1805
  %v1807 = vand.u32 %v1058, 4294901760
  %1808 = vmatmul.f32.gmra.mxu0 %v1807
  %v1809 = vpop.f32.mrf.mxu0
  %v1810 = vadd.f32 %v1717, %v1809
  %v1811 = vand.u32 %v1061, 4294901760
  %1812 = vmatmul.f32.gmra.mxu0 %v1811
  %v1813 = vpop.f32.mrf.mxu0
  %v1814 = vadd.f32 %v1721, %v1813
  %v1815 = vand.u32 %v1064, 4294901760
  %1816 = vmatmul.f32.gmra.mxu0 %v1815
  %v1817 = vpop.f32.mrf.mxu0
  %v1818 = vadd.f32 %v1725, %v1817
  %1819 = vdwg.mxu0
  %vm1820 = vcmask 261120
  %1821 = vst.msk [vmem:[%s5] sm:$0xff] %vm1820, %v955
  %1822 = vst.msk [vmem:[%s5 + $0x8] sm:$0xff] %vm1820, %v959
  %1823 = vst.msk [vmem:[%s5 + $0x10] sm:$0xff] %vm1820, %v963
  %1824 = vst.msk [vmem:[%s5 + $0x18] sm:$0xff] %vm1820, %v967
  %1825 = vst.msk [vmem:[%s5 + $0x20] sm:$0xff] %vm1820, %v971
  %1826 = vst.msk [vmem:[%s5 + $0x28] sm:$0xff] %vm1820, %v975
  %1827 = vst.msk [vmem:[%s5 + $0x30] sm:$0xff] %vm1820, %v979
  %1828 = vst.msk [vmem:[%s5 + $0x38] sm:$0xff] %vm1820, %v983
  %1829 = vst.msk [vmem:[%s5 + $0x40] sm:$0xff] %vm1820, %v987
  %1830 = vst.msk [vmem:[%s5 + $0x48] sm:$0xff] %vm1820, %v991
  %1831 = vst.msk [vmem:[%s5 + $0x50] sm:$0xff] %vm1820, %v995
  %1832 = vst.msk [vmem:[%s5 + $0x58] sm:$0xff] %vm1820, %v999
  %1833 = vst.msk [vmem:[%s5 + $0x60] sm:$0xff] %vm1820, %v1003
  %1834 = vst.msk [vmem:[%s5 + $0x68] sm:$0xff] %vm1820, %v1007
  %1835 = vst.msk [vmem:[%s5 + $0x70] sm:$0xff] %vm1820, %v1011
  %1836 = vst.msk [vmem:[%s5 + $0x78] sm:$0xff] %vm1820, %v1015
  %1837 = vst.msk [vmem:[%s6] sm:$0xff] %vm1820, %v1758
  %1838 = vst.msk [vmem:[%s6 + $0x8] sm:$0xff] %vm1820, %v1762
  %1839 = vst.msk [vmem:[%s6 + $0x10] sm:$0xff] %vm1820, %v1766
  %1840 = vst.msk [vmem:[%s6 + $0x18] sm:$0xff] %vm1820, %v1770
  %1841 = vst.msk [vmem:[%s6 + $0x20] sm:$0xff] %vm1820, %v1774
  %1842 = vst.msk [vmem:[%s6 + $0x28] sm:$0xff] %vm1820, %v1778
  %1843 = vst.msk [vmem:[%s6 + $0x30] sm:$0xff] %vm1820, %v1782
  %1844 = vst.msk [vmem:[%s6 + $0x38] sm:$0xff] %vm1820, %v1786
  %1845 = vst.msk [vmem:[%s6 + $0x40] sm:$0xff] %vm1820, %v1790
  %1846 = vst.msk [vmem:[%s6 + $0x48] sm:$0xff] %vm1820, %v1794
  %1847 = vst.msk [vmem:[%s6 + $0x50] sm:$0xff] %vm1820, %v1798
  %1848 = vst.msk [vmem:[%s6 + $0x58] sm:$0xff] %vm1820, %v1802
  %1849 = vst.msk [vmem:[%s6 + $0x60] sm:$0xff] %vm1820, %v1806
  %1850 = vst.msk [vmem:[%s6 + $0x68] sm:$0xff] %vm1820, %v1810
  %1851 = vst.msk [vmem:[%s6 + $0x70] sm:$0xff] %vm1820, %v1814
  %1852 = vst.msk [vmem:[%s6 + $0x78] sm:$0xff] %vm1820, %v1818
  %v1853 = vmul.f32 %v955, %v1758
  %v1854 = vmul.f32 %v959, %v1762
  %v1855 = vmul.f32 %v963, %v1766
  %v1856 = vmul.f32 %v967, %v1770
  %v1857 = vmul.f32 %v971, %v1774
  %v1858 = vmul.f32 %v975, %v1778
  %v1859 = vmul.f32 %v979, %v1782
  %v1860 = vmul.f32 %v983, %v1786
  %v1861 = vmul.f32 %v987, %v1790
  %v1862 = vmul.f32 %v991, %v1794
  %v1863 = vmul.f32 %v995, %v1798
  %v1864 = vmul.f32 %v999, %v1802
  %v1865 = vmul.f32 %v1003, %v1806
  %v1866 = vmul.f32 %v1007, %v1810
  %v1867 = vmul.f32 %v1011, %v1814
  %v1868 = vmul.f32 %v1015, %v1818
  %v1869 = vsel %vm1820, %v1853, 0.0
  %1870 = vadd.xlane.f32.xlu0 %v1869
  %v1871 = vpop.xlane.xlu0 %1870
  %v1872 = vsel %vm1820, %v1854, 0.0
  %1873 = vadd.xlane.f32.xlu0 %v1872
  %v1874 = vpop.xlane.xlu0 %1873
  %v1875 = vsel %vm1820, %v1855, 0.0
  %1876 = vadd.xlane.f32.xlu0 %v1875
  %v1877 = vpop.xlane.xlu0 %1876
  %v1878 = vsel %vm1820, %v1856, 0.0
  %1879 = vadd.xlane.f32.xlu0 %v1878
  %v1880 = vpop.xlane.xlu0 %1879
  %v1881 = vsel %vm1820, %v1857, 0.0
  %1882 = vadd.xlane.f32.xlu0 %v1881
  %v1883 = vpop.xlane.xlu0 %1882
  %v1884 = vsel %vm1820, %v1858, 0.0
  %1885 = vadd.xlane.f32.xlu0 %v1884
  %v1886 = vpop.xlane.xlu0 %1885
  %v1887 = vsel %vm1820, %v1859, 0.0
  %1888 = vadd.xlane.f32.xlu0 %v1887
  %v1889 = vpop.xlane.xlu0 %1888
  %v1890 = vsel %vm1820, %v1860, 0.0
  %1891 = vadd.xlane.f32.xlu0 %v1890
  %v1892 = vpop.xlane.xlu0 %1891
  %v1893 = vsel %vm1820, %v1861, 0.0
  %1894 = vadd.xlane.f32.xlu0 %v1893
  %v1895 = vpop.xlane.xlu0 %1894
  %v1896 = vsel %vm1820, %v1862, 0.0
  %1897 = vadd.xlane.f32.xlu0 %v1896
  %v1898 = vpop.xlane.xlu0 %1897
  %v1899 = vsel %vm1820, %v1863, 0.0
  %1900 = vadd.xlane.f32.xlu0 %v1899
  %v1901 = vpop.xlane.xlu0 %1900
  %v1902 = vsel %vm1820, %v1864, 0.0
  %1903 = vadd.xlane.f32.xlu0 %v1902
  %v1904 = vpop.xlane.xlu0 %1903
  %v1905 = vsel %vm1820, %v1865, 0.0
  %1906 = vadd.xlane.f32.xlu0 %v1905
  %v1907 = vpop.xlane.xlu0 %1906
  %v1908 = vsel %vm1820, %v1866, 0.0
  %1909 = vadd.xlane.f32.xlu0 %v1908
  %v1910 = vpop.xlane.xlu0 %1909
  %v1911 = vsel %vm1820, %v1867, 0.0
  %1912 = vadd.xlane.f32.xlu0 %v1911
  %v1913 = vpop.xlane.xlu0 %1912
  %v1914 = vsel %vm1820, %v1868, 0.0
  %1915 = vadd.xlane.f32.xlu0 %v1914
  %v1916 = vpop.xlane.xlu0 %1915
  %vm1917 = vcmask 7168
  %1918 = vst.msk [vmem:[%s4] sm:$0xff] %vm1917, %v1871
  %1919 = vst.msk [vmem:[%s4 + $0x8] sm:$0xff] %vm1917, %v1874
  %1920 = vst.msk [vmem:[%s4 + $0x10] sm:$0xff] %vm1917, %v1877
  %1921 = vst.msk [vmem:[%s4 + $0x18] sm:$0xff] %vm1917, %v1880
  %1922 = vst.msk [vmem:[%s4 + $0x20] sm:$0xff] %vm1917, %v1883
  %1923 = vst.msk [vmem:[%s4 + $0x28] sm:$0xff] %vm1917, %v1886
  %1924 = vst.msk [vmem:[%s4 + $0x30] sm:$0xff] %vm1917, %v1889
  %1925 = vst.msk [vmem:[%s4 + $0x38] sm:$0xff] %vm1917, %v1892
  %1926 = vst.msk [vmem:[%s4 + $0x40] sm:$0xff] %vm1917, %v1895
  %1927 = vst.msk [vmem:[%s4 + $0x48] sm:$0xff] %vm1917, %v1898
  %1928 = vst.msk [vmem:[%s4 + $0x50] sm:$0xff] %vm1917, %v1901
  %1929 = vst.msk [vmem:[%s4 + $0x58] sm:$0xff] %vm1917, %v1904
  %1930 = vst.msk [vmem:[%s4 + $0x60] sm:$0xff] %vm1917, %v1907
  %1931 = vst.msk [vmem:[%s4 + $0x68] sm:$0xff] %vm1917, %v1910
  %1932 = vst.msk [vmem:[%s4 + $0x70] sm:$0xff] %vm1917, %v1913
  %1933 = vst.msk [vmem:[%s4 + $0x78] sm:$0xff] %vm1917, %v1916
  // Predicated region
  $region18: #{tpu_custom_call.1} parent=0 // pred_check
    _
  $region19: #{tpu_custom_call.1} parent=0 // pred_check_branch
    %1935 = sbr.rel (0) target = $region21
  $region20: #{tpu_custom_call.1} parent=0 // pred_region
    _
  $region21: #{tpu_custom_call.1} parent=0 // pred_fallthru
    _
  // Predicated region
  $region22: #{tpu_custom_call.1} parent=0 // pred_check
    _
  $region23: #{tpu_custom_call.1} parent=0 // pred_check_branch
    %1937 = sbr.rel (0) target = $region25
  $region24: #{tpu_custom_call.1} parent=0 // pred_region
    _
  $region25: #{tpu_custom_call.1} parent=0 // pred_fallthru
    _
  // Predicated region
  $region26: #{tpu_custom_call.1} parent=0 // pred_check
    _
  $region27: #{tpu_custom_call.1} parent=0 // pred_check_branch
    %1939 = sbr.rel (0) target = $region29
  $region28: #{tpu_custom_call.1} parent=0 // pred_region
    _
  $region29: #{tpu_custom_call.1} parent=0 // pred_fallthru
    _
  // Predicated region
  $region30: #{tpu_custom_call.1} parent=0 // pred_check
    _
  $region31: #{tpu_custom_call.1} parent=0 // pred_check_branch
    %1941 = sbr.rel (0) target = $region33
  $region32: #{tpu_custom_call.1} parent=0 // pred_region
    _
  $region33: #{tpu_custom_call.1} parent=0 // pred_fallthru
    _
  // Predicated region
  $region34: #{tpu_custom_call.1} parent=0 // pred_check
    _
  $region35: #{tpu_custom_call.1} parent=0 // pred_check_branch
    %1943 = sbr.rel (0) target = $region37
  $region36: #{tpu_custom_call.1} parent=0 // pred_region
    _
  $region37: #{tpu_custom_call.1} parent=0 // pred_fallthru
    _
  // Predicated region
  $region38: #{tpu_custom_call.1} parent=0 // pred_check
    _
  $region39: #{tpu_custom_call.1} parent=0 // pred_check_branch
    %1945 = sbr.rel (0) target = $region41
  $region40: #{tpu_custom_call.1} parent=0 // pred_region
    _
  $region41: #{tpu_custom_call.1} parent=0 // pred_fallthru
    _

</llo_original>
